<compile_context>
chip_gen: v7x
topology: tpu7x:2x2x1
jax: 0.10.0
libtpu: 0.0.40
codegen_flags: <defaults>
</compile_context>

<pallas_src>
import functools

import jax
import jax.numpy as jnp
from jax.experimental import pallas as pl
from jax.experimental.pallas import tpu as pltpu


def _conv_bn_hswish_kernel(x_ref, w_ref, scale_ref, bias_ref, o_ref, *,
                           KH, KW, stride, Wp, n_cols, B):
    # x_ref:     (B, Cin, S)          bf16 flattened padded images
    # w_ref:     (KH*KW, Cout, Cin)   bf16 conv weight (no BN scale folded in)
    # scale_ref: (Cout, 1)            f32 BN scale  (gamma * rsqrt(var + eps))
    # bias_ref:  (Cout, 1)            f32 BN bias   (beta - mean * scale)
    # o_ref:     (B, Cout, n_cols)    output (n_cols = OH * Wp, valid cols ow < OW)
    Cout = w_ref.shape[1]
    scale = scale_ref[...]          # (Cout, 1) -> broadcasts over lanes
    bias = bias_ref[...]

    for b in range(B):                              # static unroll over images
        acc = jnp.zeros((Cout, n_cols), jnp.float32)
        for kh in range(KH):                        # static unroll over taps
            for kw in range(KW):
                k = kh * KW + kw
                s_k = kh * Wp + kw                  # flat shift of this tap
                if stride == 1:
                    rhs = x_ref[b, :, pl.ds(s_k, n_cols)]            # (Cin, n_cols)
                else:
                    rhs = x_ref[b, :, pl.ds(s_k, n_cols, stride=stride)]
                acc = acc + jnp.dot(w_ref[k], rhs,
                                    preferred_element_type=jnp.float32)

        y = acc * scale + bias                      # f32 BN epilogue (3-ish vregs)
        # Hardswish: x * relu6(x + 3) / 6
        y = y * jnp.clip(y + 3.0, 0.0, 6.0) * (1.0 / 6.0)
        o_ref[b] = y.astype(o_ref.dtype)            # lane-dense store, no reshape


def conv_bn_hswish(x_nchw, weight, gamma, beta, running_mean, running_var, *,
                   stride, padding, eps=1e-5, compute_dtype=jnp.bfloat16,
                   images_per_step=None):
    """ConvBNLayer forward (eval-mode BN), NCHW in -> NCHW out."""
    N, Cin, H, W = x_nchw.shape
    Cout, Cin_w, KH, KW = weight.shape
    assert Cin == Cin_w, "num_groups > 1 (grouped conv) not supported"

    OH = (H + 2 * padding - KH) // stride + 1
    OW = (W + 2 * padding - KW) // stride + 1
    Hp, Wp = H + 2 * padding, W + 2 * padding

    # Flattened-column conv: output column q = oh*Wp + ow, tap shift s = kh*Wp + kw,
    # read index = stride*q + s.  We compute all q in [0, OH*Wp) (columns with
    # ow >= OW are garbage and sliced off below).  Pad a few extra bottom rows so
    # the garbage columns' reads stay in bounds.
    n_cols = OH * Wp
    s_max = (KH - 1) * Wp + (KW - 1)
    need = stride * (n_cols - 1) + s_max + 1
    extra_rows = max(0, -(-(max(0, need - Hp * Wp)) // Wp))
    S = (Hp + extra_rows) * Wp

    # One fused pad + cast (no layout transposes); flatten per channel (free, row-major).
    xp = jnp.pad(x_nchw, ((0, 0), (0, 0),
                          (padding, padding + extra_rows),
                          (padding, padding)))
    xp = xp.astype(compute_dtype).reshape(N, Cin, S)

    # Weight: (Cout, Cin, KH, KW) -> (KH*KW, Cout, Cin), plain bf16 (no BN fold).
    w = jnp.transpose(weight, (2, 3, 0, 1)).reshape(KH * KW, Cout, Cin)
    w = w.astype(compute_dtype)

    # BN (eval) as f32 per-channel scale / bias, applied in the kernel epilogue.
    inv_std = jax.lax.rsqrt(running_var.astype(jnp.float32) + eps)
    scale = (gamma.astype(jnp.float32) * inv_std).reshape(Cout, 1)
    bias = (beta.astype(jnp.float32)
            - running_mean.astype(jnp.float32) * scale[:, 0]).reshape(Cout, 1)

    # Images per grid step: amortize per-step overhead, but keep >= 2 grid steps
    # so both v7x TensorCores get work.  Per-step VMEM stays tiny at these sizes.
    if images_per_step is None:
        B = 1
        while (N % (2 * B) == 0) and (N // (2 * B) >= 2) and (2 * B * n_cols <= 4096):
            B *= 2
    else:
        B = int(images_per_step)
    assert N % B == 0, "images_per_step must divide the batch"
    grid = (N // B,)

    out_dtype = x_nchw.dtype
    kernel = functools.partial(_conv_bn_hswish_kernel, KH=KH, KW=KW,
                               stride=stride, Wp=Wp, n_cols=n_cols, B=B)

    out = pl.pallas_call(
        kernel,
        out_shape=jax.ShapeDtypeStruct((N, Cout, n_cols), out_dtype),
        grid_spec=pltpu.PrefetchScalarGridSpec(
            num_scalar_prefetch=0,
            grid=grid,
            in_specs=[
                pl.BlockSpec((B, Cin, S), lambda n: (n, 0, 0)),
                pl.BlockSpec((KH * KW, Cout, Cin), lambda n: (0, 0, 0)),
                pl.BlockSpec((Cout, 1), lambda n: (0, 0)),
                pl.BlockSpec((Cout, 1), lambda n: (0, 0)),
            ],
            out_specs=pl.BlockSpec((B, Cout, n_cols), lambda n: (n, 0, 0)),
        ),
        compiler_params=pltpu.CompilerParams(
            dimension_semantics=("parallel",)),
    )(xp, w, scale, bias)

    # Drop the garbage columns (ow >= OW): free reshape + cheap output-sized slice.
    out = out.reshape(N, Cout, OH, Wp)[:, :, :, :OW]
    return out


def _reference(x_nchw, weight, gamma, beta, running_mean, running_var,
               *, stride, padding, eps=1e-5):
    y = jax.lax.conv_general_dilated(
        x_nchw, weight,
        window_strides=(stride, stride),
        padding=[(padding, padding), (padding, padding)],
        dimension_numbers=("NCHW", "OIHW", "NCHW"))
    inv_std = jax.lax.rsqrt(running_var + eps)
    scale = (gamma * inv_std)[None, :, None, None]
    bias = (beta - running_mean * gamma * inv_std)[None, :, None, None]
    y = y * scale + bias
    return y * jnp.clip(y + 3.0, 0.0, 6.0) / 6.0


if __name__ == "__main__":
    # ConvBNLayer(num_channels=4, filter_size=3, num_filters=8, stride=1)
    num_channels, filter_size, num_filters, stride = 4, 3, 8, 1
    padding = (filter_size - 1) // 2

    key = jax.random.PRNGKey(0)
    kx, kw, kg, kb, km, kv = jax.random.split(key, 6)

    x = jax.random.normal(kx, (2, num_channels, 16, 16), dtype=jnp.float32)
    weight = jax.random.normal(
        kw, (num_filters, num_channels, filter_size, filter_size),
        dtype=jnp.float32) * 0.1
    gamma = 1.0 + 0.1 * jax.random.normal(kg, (num_filters,), dtype=jnp.float32)
    beta = 0.1 * jax.random.normal(kb, (num_filters,), dtype=jnp.float32)
    running_mean = 0.1 * jax.random.normal(km, (num_filters,), dtype=jnp.float32)
    running_var = jnp.abs(1.0 + 0.1 * jax.random.normal(kv, (num_filters,),
                                                        dtype=jnp.float32))

    fwd = jax.jit(functools.partial(conv_bn_hswish, stride=stride, padding=padding))
    out = fwd(x, weight, gamma, beta, running_mean, running_var)
    out = jax.block_until_ready(out)

    ref = _reference(x, weight, gamma, beta, running_mean, running_var,
                     stride=stride, padding=padding)
    assert out.shape == (2, num_filters, 16, 16), out.shape
    # bf16 matmul operands (f32 accumulate, f32 BN epilogue) vs f32 reference.
    assert jnp.allclose(out, ref, rtol=2e-2, atol=2e-2), \
        float(jnp.max(jnp.abs(out - ref)))

    print("KERNEL_OK")
</pallas_src>

<mosaic_0001>
module attributes {stable_mosaic.version = 11 : i64} {
  func.func @_conv_bn_hswish_kernel(%arg0: i32, %arg1: memref<1x4x342xbf16, #tpu.memory_space<vmem>>, %arg2: memref<9x8x4xbf16, #tpu.memory_space<vmem>>, %arg3: memref<8x1xf32, #tpu.memory_space<vmem>>, %arg4: memref<8x1xf32, #tpu.memory_space<vmem>>, %arg5: memref<1x8x288xf32, #tpu.memory_space<vmem>>) attributes {dimension_semantics = [#tpu.dimension_semantics<parallel>], iteration_bounds = array<i64: 2>, scalar_prefetch = 0 : i64, scratch_operands = 0 : i64, tpu.core_type = #tpu.core_type<tc>, window_params = [{transform_indices = @transform_0, window_bounds = array<i64: 1, 4, 342>}, {pipeline_mode = #tpu.pipeline_mode<synchronous>, transform_indices = @transform_1, window_bounds = array<i64: 9, 8, 4>}, {pipeline_mode = #tpu.pipeline_mode<synchronous>, transform_indices = @transform_2, window_bounds = array<i64: 8, 1>}, {pipeline_mode = #tpu.pipeline_mode<synchronous>, transform_indices = @transform_3, window_bounds = array<i64: 8, 1>}, {transform_indices = @transform_4, window_bounds = array<i64: 1, 8, 288>}]} {
    %c0 = arith.constant 0 : index
    %c0_0 = arith.constant 0 : index
    %0 = vector.load %arg3[%c0, %c0_0] : memref<8x1xf32, #tpu.memory_space<vmem>>, vector<8x1xf32>
    %c0_1 = arith.constant 0 : index
    %c0_2 = arith.constant 0 : index
    %1 = vector.load %arg4[%c0_1, %c0_2] : memref<8x1xf32, #tpu.memory_space<vmem>>, vector<8x1xf32>
    %cst = arith.constant 0.000000e+00 : f32
    %2 = vector.broadcast %cst : f32 to vector<8x288xf32>
    %c0_3 = arith.constant 0 : index
    %c0_4 = arith.constant 0 : index
    %c0_5 = arith.constant 0 : index
    %3 = vector.load %arg1[%c0_3, %c0_4, %c0_5] : memref<1x4x342xbf16, #tpu.memory_space<vmem>>, vector<1x4x288xbf16>
    %4 = vector.shape_cast %3 : vector<1x4x288xbf16> to vector<4x288xbf16>
    %c0_6 = arith.constant 0 : index
    %c0_7 = arith.constant 0 : index
    %c0_8 = arith.constant 0 : index
    %5 = vector.load %arg2[%c0_6, %c0_7, %c0_8] : memref<9x8x4xbf16, #tpu.memory_space<vmem>>, vector<1x8x4xbf16>
    %6 = vector.shape_cast %5 : vector<1x8x4xbf16> to vector<8x4xbf16>
    %cst_9 = arith.constant dense<0.000000e+00> : vector<8x288xf32>
    %7 = tpu.matmul %6, %4, %cst_9 {dimension_numbers = #tpu.dot_dimension_numbers<[1], [0], [0], [1], [0, 0, 1, 1], [], []>} : vector<8x4xbf16>, vector<4x288xbf16>, vector<8x288xf32> -> vector<8x288xf32>
    %8 = arith.addf %2, %7 : vector<8x288xf32>
    %c0_10 = arith.constant 0 : index
    %c0_11 = arith.constant 0 : index
    %c1 = arith.constant 1 : index
    %9 = vector.load %arg1[%c0_10, %c0_11, %c1] : memref<1x4x342xbf16, #tpu.memory_space<vmem>>, vector<1x4x288xbf16>
    %10 = vector.shape_cast %9 : vector<1x4x288xbf16> to vector<4x288xbf16>
    %c1_12 = arith.constant 1 : index
    %c0_13 = arith.constant 0 : index
    %c0_14 = arith.constant 0 : index
    %11 = vector.load %arg2[%c1_12, %c0_13, %c0_14] : memref<9x8x4xbf16, #tpu.memory_space<vmem>>, vector<1x8x4xbf16>
    %12 = vector.shape_cast %11 : vector<1x8x4xbf16> to vector<8x4xbf16>
    %cst_15 = arith.constant dense<0.000000e+00> : vector<8x288xf32>
    %13 = tpu.matmul %12, %10, %cst_15 {dimension_numbers = #tpu.dot_dimension_numbers<[1], [0], [0], [1], [0, 0, 1, 1], [], []>} : vector<8x4xbf16>, vector<4x288xbf16>, vector<8x288xf32> -> vector<8x288xf32>
    %14 = arith.addf %8, %13 : vector<8x288xf32>
    %c0_16 = arith.constant 0 : index
    %c0_17 = arith.constant 0 : index
    %c2 = arith.constant 2 : index
    %15 = vector.load %arg1[%c0_16, %c0_17, %c2] : memref<1x4x342xbf16, #tpu.memory_space<vmem>>, vector<1x4x288xbf16>
    %16 = vector.shape_cast %15 : vector<1x4x288xbf16> to vector<4x288xbf16>
    %c2_18 = arith.constant 2 : index
    %c0_19 = arith.constant 0 : index
    %c0_20 = arith.constant 0 : index
    %17 = vector.load %arg2[%c2_18, %c0_19, %c0_20] : memref<9x8x4xbf16, #tpu.memory_space<vmem>>, vector<1x8x4xbf16>
    %18 = vector.shape_cast %17 : vector<1x8x4xbf16> to vector<8x4xbf16>
    %cst_21 = arith.constant dense<0.000000e+00> : vector<8x288xf32>
    %19 = tpu.matmul %18, %16, %cst_21 {dimension_numbers = #tpu.dot_dimension_numbers<[1], [0], [0], [1], [0, 0, 1, 1], [], []>} : vector<8x4xbf16>, vector<4x288xbf16>, vector<8x288xf32> -> vector<8x288xf32>
    %20 = arith.addf %14, %19 : vector<8x288xf32>
    %c0_22 = arith.constant 0 : index
    %c0_23 = arith.constant 0 : index
    %c18 = arith.constant 18 : index
    %21 = vector.load %arg1[%c0_22, %c0_23, %c18] : memref<1x4x342xbf16, #tpu.memory_space<vmem>>, vector<1x4x288xbf16>
    %22 = vector.shape_cast %21 : vector<1x4x288xbf16> to vector<4x288xbf16>
    %c3 = arith.constant 3 : index
    %c0_24 = arith.constant 0 : index
    %c0_25 = arith.constant 0 : index
    %23 = vector.load %arg2[%c3, %c0_24, %c0_25] : memref<9x8x4xbf16, #tpu.memory_space<vmem>>, vector<1x8x4xbf16>
    %24 = vector.shape_cast %23 : vector<1x8x4xbf16> to vector<8x4xbf16>
    %cst_26 = arith.constant dense<0.000000e+00> : vector<8x288xf32>
    %25 = tpu.matmul %24, %22, %cst_26 {dimension_numbers = #tpu.dot_dimension_numbers<[1], [0], [0], [1], [0, 0, 1, 1], [], []>} : vector<8x4xbf16>, vector<4x288xbf16>, vector<8x288xf32> -> vector<8x288xf32>
    %26 = arith.addf %20, %25 : vector<8x288xf32>
    %c0_27 = arith.constant 0 : index
    %c0_28 = arith.constant 0 : index
    %c19 = arith.constant 19 : index
    %27 = vector.load %arg1[%c0_27, %c0_28, %c19] : memref<1x4x342xbf16, #tpu.memory_space<vmem>>, vector<1x4x288xbf16>
    %28 = vector.shape_cast %27 : vector<1x4x288xbf16> to vector<4x288xbf16>
    %c4 = arith.constant 4 : index
    %c0_29 = arith.constant 0 : index
    %c0_30 = arith.constant 0 : index
    %29 = vector.load %arg2[%c4, %c0_29, %c0_30] : memref<9x8x4xbf16, #tpu.memory_space<vmem>>, vector<1x8x4xbf16>
    %30 = vector.shape_cast %29 : vector<1x8x4xbf16> to vector<8x4xbf16>
    %cst_31 = arith.constant dense<0.000000e+00> : vector<8x288xf32>
    %31 = tpu.matmul %30, %28, %cst_31 {dimension_numbers = #tpu.dot_dimension_numbers<[1], [0], [0], [1], [0, 0, 1, 1], [], []>} : vector<8x4xbf16>, vector<4x288xbf16>, vector<8x288xf32> -> vector<8x288xf32>
    %32 = arith.addf %26, %31 : vector<8x288xf32>
    %c0_32 = arith.constant 0 : index
    %c0_33 = arith.constant 0 : index
    %c20 = arith.constant 20 : index
    %33 = vector.load %arg1[%c0_32, %c0_33, %c20] : memref<1x4x342xbf16, #tpu.memory_space<vmem>>, vector<1x4x288xbf16>
    %34 = vector.shape_cast %33 : vector<1x4x288xbf16> to vector<4x288xbf16>
    %c5 = arith.constant 5 : index
    %c0_34 = arith.constant 0 : index
    %c0_35 = arith.constant 0 : index
    %35 = vector.load %arg2[%c5, %c0_34, %c0_35] : memref<9x8x4xbf16, #tpu.memory_space<vmem>>, vector<1x8x4xbf16>
    %36 = vector.shape_cast %35 : vector<1x8x4xbf16> to vector<8x4xbf16>
    %cst_36 = arith.constant dense<0.000000e+00> : vector<8x288xf32>
    %37 = tpu.matmul %36, %34, %cst_36 {dimension_numbers = #tpu.dot_dimension_numbers<[1], [0], [0], [1], [0, 0, 1, 1], [], []>} : vector<8x4xbf16>, vector<4x288xbf16>, vector<8x288xf32> -> vector<8x288xf32>
    %38 = arith.addf %32, %37 : vector<8x288xf32>
    %c0_37 = arith.constant 0 : index
    %c0_38 = arith.constant 0 : index
    %c36 = arith.constant 36 : index
    %39 = vector.load %arg1[%c0_37, %c0_38, %c36] : memref<1x4x342xbf16, #tpu.memory_space<vmem>>, vector<1x4x288xbf16>
    %40 = vector.shape_cast %39 : vector<1x4x288xbf16> to vector<4x288xbf16>
    %c6 = arith.constant 6 : index
    %c0_39 = arith.constant 0 : index
    %c0_40 = arith.constant 0 : index
    %41 = vector.load %arg2[%c6, %c0_39, %c0_40] : memref<9x8x4xbf16, #tpu.memory_space<vmem>>, vector<1x8x4xbf16>
    %42 = vector.shape_cast %41 : vector<1x8x4xbf16> to vector<8x4xbf16>
    %cst_41 = arith.constant dense<0.000000e+00> : vector<8x288xf32>
    %43 = tpu.matmul %42, %40, %cst_41 {dimension_numbers = #tpu.dot_dimension_numbers<[1], [0], [0], [1], [0, 0, 1, 1], [], []>} : vector<8x4xbf16>, vector<4x288xbf16>, vector<8x288xf32> -> vector<8x288xf32>
    %44 = arith.addf %38, %43 : vector<8x288xf32>
    %c0_42 = arith.constant 0 : index
    %c0_43 = arith.constant 0 : index
    %c37 = arith.constant 37 : index
    %45 = vector.load %arg1[%c0_42, %c0_43, %c37] : memref<1x4x342xbf16, #tpu.memory_space<vmem>>, vector<1x4x288xbf16>
    %46 = vector.shape_cast %45 : vector<1x4x288xbf16> to vector<4x288xbf16>
    %c7 = arith.constant 7 : index
    %c0_44 = arith.constant 0 : index
    %c0_45 = arith.constant 0 : index
    %47 = vector.load %arg2[%c7, %c0_44, %c0_45] : memref<9x8x4xbf16, #tpu.memory_space<vmem>>, vector<1x8x4xbf16>
    %48 = vector.shape_cast %47 : vector<1x8x4xbf16> to vector<8x4xbf16>
    %cst_46 = arith.constant dense<0.000000e+00> : vector<8x288xf32>
    %49 = tpu.matmul %48, %46, %cst_46 {dimension_numbers = #tpu.dot_dimension_numbers<[1], [0], [0], [1], [0, 0, 1, 1], [], []>} : vector<8x4xbf16>, vector<4x288xbf16>, vector<8x288xf32> -> vector<8x288xf32>
    %50 = arith.addf %44, %49 : vector<8x288xf32>
    %c0_47 = arith.constant 0 : index
    %c0_48 = arith.constant 0 : index
    %c38 = arith.constant 38 : index
    %51 = vector.load %arg1[%c0_47, %c0_48, %c38] : memref<1x4x342xbf16, #tpu.memory_space<vmem>>, vector<1x4x288xbf16>
    %52 = vector.shape_cast %51 : vector<1x4x288xbf16> to vector<4x288xbf16>
    %c8 = arith.constant 8 : index
    %c0_49 = arith.constant 0 : index
    %c0_50 = arith.constant 0 : index
    %53 = vector.load %arg2[%c8, %c0_49, %c0_50] : memref<9x8x4xbf16, #tpu.memory_space<vmem>>, vector<1x8x4xbf16>
    %54 = vector.shape_cast %53 : vector<1x8x4xbf16> to vector<8x4xbf16>
    %cst_51 = arith.constant dense<0.000000e+00> : vector<8x288xf32>
    %55 = tpu.matmul %54, %52, %cst_51 {dimension_numbers = #tpu.dot_dimension_numbers<[1], [0], [0], [1], [0, 0, 1, 1], [], []>} : vector<8x4xbf16>, vector<4x288xbf16>, vector<8x288xf32> -> vector<8x288xf32>
    %56 = arith.addf %50, %55 : vector<8x288xf32>
    %57 = vector.broadcast %0 : vector<8x1xf32> to vector<8x288xf32>
    %58 = arith.mulf %56, %57 : vector<8x288xf32>
    %59 = vector.broadcast %1 : vector<8x1xf32> to vector<8x288xf32>
    %60 = arith.addf %58, %59 : vector<8x288xf32>
    %cst_52 = arith.constant 3.000000e+00 : f32
    %61 = vector.broadcast %cst_52 : f32 to vector<8x288xf32>
    %62 = arith.addf %60, %61 : vector<8x288xf32>
    %cst_53 = arith.constant 0.000000e+00 : f32
    %cst_54 = arith.constant 6.000000e+00 : f32
    %63 = vector.broadcast %cst_53 : f32 to vector<8x288xf32>
    %64 = arith.maximumf %63, %62 : vector<8x288xf32>
    %65 = vector.broadcast %cst_54 : f32 to vector<8x288xf32>
    %66 = arith.minimumf %65, %64 : vector<8x288xf32>
    %67 = arith.mulf %60, %66 : vector<8x288xf32>
    %cst_55 = arith.constant 0.166666672 : f32
    %68 = vector.broadcast %cst_55 : f32 to vector<8x288xf32>
    %69 = arith.mulf %67, %68 : vector<8x288xf32>
    %c0_56 = arith.constant 0 : index
    %c0_57 = arith.constant 0 : index
    %c0_58 = arith.constant 0 : index
    %70 = vector.load %arg5[%c0_56, %c0_57, %c0_58] : memref<1x8x288xf32, #tpu.memory_space<vmem>>, vector<1x8x288xf32>
    %71 = vector.shape_cast %70 : vector<1x8x288xf32> to vector<8x288xf32>
    %72 = vector.shape_cast %69 : vector<8x288xf32> to vector<1x8x288xf32>
    tpu.vector_store %arg5[%c0_56, %c0_57, %c0_58], %72 {strides = array<i32>} : memref<1x8x288xf32, #tpu.memory_space<vmem>>, vector<1x8x288xf32>,
    return
  }
  func.func @transform_0(%arg0: i32) -> (i32, i32, i32) {
    %c0_i32 = arith.constant 0 : i32
    %c0_i32_0 = arith.constant 0 : i32
    %c0_i32_1 = arith.constant 0 : i32
    return %arg0, %c0_i32, %c0_i32_0 : i32, i32, i32
  }
  func.func @transform_1(%arg0: i32) -> (i32, i32, i32) {
    %c0_i32 = arith.constant 0 : i32
    %c0_i32_0 = arith.constant 0 : i32
    %c0_i32_1 = arith.constant 0 : i32
    %c0_i32_2 = arith.constant 0 : i32
    return %c0_i32, %c0_i32_0, %c0_i32_1 : i32, i32, i32
  }
  func.func @transform_2(%arg0: i32) -> (i32, i32) {
    %c0_i32 = arith.constant 0 : i32
    %c0_i32_0 = arith.constant 0 : i32
    %c0_i32_1 = arith.constant 0 : i32
    return %c0_i32, %c0_i32_0 : i32, i32
  }
  func.func @transform_3(%arg0: i32) -> (i32, i32) {
    %c0_i32 = arith.constant 0 : i32
    %c0_i32_0 = arith.constant 0 : i32
    %c0_i32_1 = arith.constant 0 : i32
    return %c0_i32, %c0_i32_0 : i32, i32
  }
  func.func @transform_4(%arg0: i32) -> (i32, i32, i32) {
    %c0_i32 = arith.constant 0 : i32
    %c0_i32_0 = arith.constant 0 : i32
    %c0_i32_1 = arith.constant 0 : i32
    return %arg0, %c0_i32, %c0_i32_0 : i32, i32, i32
  }
}

</mosaic_0001>

<llo_original>
// kernel: conv_bn_hswish.1
$region0: #{conv_bn_hswish.1}
  #allocation0 [shape = 'u32[]', space=smem, size = 0x4, offset = 0x4, fixed_abs, tag = 'smem constant byte address 0x4 - core index']
  #allocation1 [shape = 'u32[144,128]{1,0:T(1,128)}', space=vmem, size = 0x12000, scoped, tag = 'internal scratch']
  %s0 = inlined_call_operand.vmem [shape: bf16[2,4,342], index: 0, kind: input, shape index: {}]
  %s1 = inlined_call_operand.vmem [shape: bf16[9,8,4], index: 1, kind: input, shape index: {}]
  %s2 = inlined_call_operand.vmem [shape: f32[8,1], index: 2, kind: input, shape index: {}]
  %s3 = inlined_call_operand.vmem [shape: f32[8,1], index: 3, kind: input, shape index: {}]
  %s4 = inlined_call_operand.vmem [shape: f32[2,8,288], index: 4, kind: output, shape index: {}]
  %s5 = sld [smem:[#allocation0]]
  $region49: #{conv_bn_hswish.1} parent=0
    _
  %s7 = ssub.s32 1, %s5
  %s8 = scalar_select 0, %s7, %s5
  loop: start=0, step=1, limit=4
  $region2: #{conv_bn_hswish.1} parent=0 // loop_pre_header
    _
  $region3: #{conv_bn_hswish.1} parent=0 // loop_header
    %s10 = sphi 0, %s14
    %p11 = scmp.ge.s32.totalorder %s10, 4
    %s20 = sphi 0, %s22
    %s23 = sphi 0, %s20
    %s24 = sphi 0, %s23
    %s40 = sphi 0, %s24
    %s44 = sphi 0, %s44
    %s46 = sphi 0, %s44
    %s47 = sphi 0, %s46
    %s61 = sphi 0, %s47
    %s65 = sphi 0, %s65
    %s67 = sphi 0, %s65
    %s68 = sphi 0, %s67
    %s82 = sphi 0, %s68
    %s86 = sphi 0, %s86
    %s88 = sphi 0, %s86
    %s89 = sphi 0, %s88
    %s103 = sphi 0, %s89
    %s109 = sphi 0, %s111
    %s112 = sphi 0, %s109
    %s113 = sphi 0, %s112
    %s129 = sphi 0, %s113
  $region4: #{conv_bn_hswish.1} parent=0 // loop_header_branch
    %13 = sbr.rel (%p11) target = $region8
  $region5: #{conv_bn_hswish.1} parent=0 // loop_body
    %s15 = ssub.s32 %s10, 1
    %s16 = ssub.s32 %s10, 2
    %s17 = sadd.s32 %s10, 1
    %s18 = ssub.s32 %s10, %s17
    %p19 = scmp.eq.s32.totalorder %s18, 0
    %s21 = sadd.s32 %s20, 1
    %s22 = scalar_select %p19, %s20, %s21
    %p25 = pneg %p19
    %p26 = scmp.eq.s32.totalorder %s10, 1
    %p27 = por %p25, %p26
    %p28 = scmp.ne.s32.totalorder %s20, %s23
    %p29 = scmp.eq.s32.totalorder %s10, 0
    %p30 = por %p28, %p29
    %p31 = scmp.ne.s32.totalorder %s20, %s23
    %p32 = scmp.eq.s32.totalorder %s15, 1
    %p33 = por %p31, %p32
    %p34 = scmp.ne.s32.totalorder %s23, %s24
    %p35 = scmp.eq.s32.totalorder %s15, 0
    %p36 = por %p34, %p35
    %p37 = scmp.ne.s32.totalorder %s23, %s24
    %p38 = scmp.eq.s32.totalorder %s16, 1
    %p39 = por %p37, %p38
    %p41 = scmp.ne.s32.totalorder %s24, %s40
    %p42 = scmp.eq.s32.totalorder %s16, 0
    %p43 = por %p41, %p42
    %s45 = sadd.s32 %s44, 1
    %p48 = scmp.eq.s32.totalorder %s10, 1
    %p49 = scmp.ne.s32.totalorder %s44, %s46
    %p50 = scmp.eq.s32.totalorder %s10, 0
    %p51 = por %p49, %p50
    %p52 = scmp.ne.s32.totalorder %s44, %s46
    %p53 = scmp.eq.s32.totalorder %s15, 1
    %p54 = por %p52, %p53
    %p55 = scmp.ne.s32.totalorder %s46, %s47
    %p56 = scmp.eq.s32.totalorder %s15, 0
    %p57 = por %p55, %p56
    %p58 = scmp.ne.s32.totalorder %s46, %s47
    %p59 = scmp.eq.s32.totalorder %s16, 1
    %p60 = por %p58, %p59
    %p62 = scmp.ne.s32.totalorder %s47, %s61
    %p63 = scmp.eq.s32.totalorder %s16, 0
    %p64 = por %p62, %p63
    %s66 = sadd.s32 %s65, 1
    %p69 = scmp.eq.s32.totalorder %s10, 1
    %p70 = scmp.ne.s32.totalorder %s65, %s67
    %p71 = scmp.eq.s32.totalorder %s10, 0
    %p72 = por %p70, %p71
    %p73 = scmp.ne.s32.totalorder %s65, %s67
    %p74 = scmp.eq.s32.totalorder %s15, 1
    %p75 = por %p73, %p74
    %p76 = scmp.ne.s32.totalorder %s67, %s68
    %p77 = scmp.eq.s32.totalorder %s15, 0
    %p78 = por %p76, %p77
    %p79 = scmp.ne.s32.totalorder %s67, %s68
    %p80 = scmp.eq.s32.totalorder %s16, 1
    %p81 = por %p79, %p80
    %p83 = scmp.ne.s32.totalorder %s68, %s82
    %p84 = scmp.eq.s32.totalorder %s16, 0
    %p85 = por %p83, %p84
    %s87 = sadd.s32 %s86, 1
    %p90 = scmp.eq.s32.totalorder %s10, 1
    %p91 = scmp.ne.s32.totalorder %s86, %s88
    %p92 = scmp.eq.s32.totalorder %s10, 0
    %p93 = por %p91, %p92
    %p94 = scmp.ne.s32.totalorder %s86, %s88
    %p95 = scmp.eq.s32.totalorder %s15, 1
    %p96 = por %p94, %p95
    %p97 = scmp.ne.s32.totalorder %s88, %s89
    %p98 = scmp.eq.s32.totalorder %s15, 0
    %p99 = por %p97, %p98
    %p100 = scmp.ne.s32.totalorder %s88, %s89
    %p101 = scmp.eq.s32.totalorder %s16, 1
    %p102 = por %p100, %p101
    %p104 = scmp.ne.s32.totalorder %s89, %s103
    %p105 = scmp.eq.s32.totalorder %s16, 0
    %p106 = por %p104, %p105
    %s107 = ssub.s32 %s10, %s17
    %p108 = scmp.eq.s32.totalorder %s107, 0
    %s110 = sadd.s32 %s109, 1
    %s111 = scalar_select %p108, %s109, %s110
    %p114 = pneg %p108
    %p115 = scmp.eq.s32.totalorder %s10, 1
    %p116 = por %p114, %p115
    %p117 = scmp.ne.s32.totalorder %s109, %s112
    %p118 = scmp.eq.s32.totalorder %s10, 0
    %p119 = por %p117, %p118
    %p120 = scmp.ne.s32.totalorder %s109, %s112
    %p121 = scmp.eq.s32.totalorder %s15, 1
    %p122 = por %p120, %p121
    %p123 = scmp.ne.s32.totalorder %s112, %s113
    %p124 = scmp.eq.s32.totalorder %s15, 0
    %p125 = por %p123, %p124
    %p126 = scmp.ne.s32.totalorder %s112, %s113
    %p127 = scmp.eq.s32.totalorder %s16, 1
    %p128 = por %p126, %p127
    %p130 = scmp.ne.s32.totalorder %s113, %s129
    %p131 = scmp.eq.s32.totalorder %s16, 0
    %p132 = por %p130, %p131
    %p133 = scmp.le.s32.totalorder 1, %s10
    %p134 = scmp.lt.s32.totalorder %s10, 3
    %p135 = pnand %p133, %p134
    %p136 = pneg %p135
    // Predicated region
    $region9: #{conv_bn_hswish.1} parent=5 // pred_check
      _
    $region10: #{conv_bn_hswish.1} parent=5 // pred_check_branch
      %138 = sbr.rel (%p135) target = $region12
    $region11: #{conv_bn_hswish.1} parent=5 // pred_region
      %s139 = ssub.s32 %s10, 1
      // Predicated region
      $region13: #{conv_bn_hswish.1} parent=11 // pred_check
        %p140 = pneg %p57
      $region14: #{conv_bn_hswish.1} parent=11 // pred_check_branch
        %142 = sbr.rel (%p140) target = $region16
      $region15: #{conv_bn_hswish.1} parent=11 // pred_region
        _
      $region16: #{conv_bn_hswish.1} parent=11 // pred_fallthru
        _
      // Predicated region
      $region17: #{conv_bn_hswish.1} parent=11 // pred_check
        %p143 = pneg %p78
      $region18: #{conv_bn_hswish.1} parent=11 // pred_check_branch
        %145 = sbr.rel (%p143) target = $region20
      $region19: #{conv_bn_hswish.1} parent=11 // pred_region
        _
      $region20: #{conv_bn_hswish.1} parent=11 // pred_fallthru
        _
      // Predicated region
      $region21: #{conv_bn_hswish.1} parent=11 // pred_check
        %p146 = pneg %p99
      $region22: #{conv_bn_hswish.1} parent=11 // pred_check_branch
        %148 = sbr.rel (%p146) target = $region24
      $region23: #{conv_bn_hswish.1} parent=11 // pred_region
        _
      $region24: #{conv_bn_hswish.1} parent=11 // pred_fallthru
        _
    $region12: #{conv_bn_hswish.1} parent=5 // pred_fallthru
      _
    %p149 = scmp.lt.s32.totalorder %s10, 2
    // Predicated region
    $region25: #{conv_bn_hswish.1} parent=5 // pred_check
      %p150 = pneg %p149
    $region26: #{conv_bn_hswish.1} parent=5 // pred_check_branch
      %152 = sbr.rel (%p150) target = $region28
    $region27: #{conv_bn_hswish.1} parent=5 // pred_region
      // Predicated region
      $region29: #{conv_bn_hswish.1} parent=27 // pred_check
        %p153 = pneg %p30
      $region30: #{conv_bn_hswish.1} parent=27 // pred_check_branch
        %155 = sbr.rel (%p153) target = $region32
      $region31: #{conv_bn_hswish.1} parent=27 // pred_region
        %p156 = scmp.lt.s32.totalorder %s10, 1
        %s157 = scalar_select %p156, %s10, 1
        %s158 = smul.addr %s157, 3
        %s159 = smul.addr %s158, 2
        %s160 = scalar_lea.vmem %s0, %s159
      $region32: #{conv_bn_hswish.1} parent=27 // pred_fallthru
        _
    $region28: #{conv_bn_hswish.1} parent=5 // pred_fallthru
      _
    %p161 = scmp.le.s32.totalorder 1, %s10
    %p162 = scmp.lt.s32.totalorder %s10, 3
    %p163 = pnand %p161, %p162
    %p164 = pneg %p163
    // Predicated region
    $region33: #{conv_bn_hswish.1} parent=5 // pred_check
      _
    $region34: #{conv_bn_hswish.1} parent=5 // pred_check_branch
      %166 = sbr.rel (%p163) target = $region36
    $region35: #{conv_bn_hswish.1} parent=5 // pred_region
      %s167 = ssub.s32 %s10, 1
      %p168 = scmp.lt.s32.totalorder %s15, 1
      %s169 = scalar_select %p168, %s15, 1
      %s170 = smul.addr %s169, 3
      %s171 = smul.addr %s170, 2
      %s172 = scalar_lea.vmem %s0, %s171
      %p173 = pneg %p36
      %p174 = pneg %p33
      %p175 = pneg %p57
      %p176 = pneg %p54
      %p177 = pneg %p78
      %p178 = pneg %p75
      %p179 = pneg %p99
      %p180 = pneg %p96
      %p181 = pneg %p125
      %p182 = pneg %p122
      %p183 = scmp.lt.s32.totalorder %s15, 1
      %s184 = scalar_select %p183, %s15, 1
      %s185 = smul.addr %s184, 3
      %s186 = smul.addr %s185, 8
      %s187 = scalar_lea.vmem %s4, %s186
      %p188 = scmp.lt.s32.totalorder %s15, 1
      %s189 = scalar_select %p188, %s15, 1
      %s190 = smul.addr %s189, 3
      %s191 = smul.addr %s190, 2
      %s192 = scalar_lea.vmem %s0, %s191
      %p193 = scmp.lt.s32.totalorder %s15, 1
      %s194 = scalar_select %p193, %s15, 1
      %s195 = smul.addr %s194, 3
      %s196 = smul.addr %s195, 8
      %s197 = scalar_lea.vmem %s4, %s196
      %v199 = vld [vmem:[%s2] sm:$0xff]
      %v200 = vld [vmem:[%s3] sm:$0xff]
      %v201 = vld [vmem:[%s192] sm:$0x3f]
      %v202 = vld [vmem:[%s1] sm:$0xf]
      %s203 = scalar_lea.vmem %s1, 4
      %v204 = vld [vmem:[%s203] sm:$0xf]
      %v206 = vcombine.high %v201, %v201
      %v208 = vunpack.c.l.s4 1983009808
      %v209 = vunpack.c.0.s8 %v208
      %v210 = vlaneseq
      %v211 = vshrl.u32 %v210, 7
      %v212 = vsub.s32 %v209, %v211
      %v213 = vrot.slane %v201, %v212
      %v215 = vunpack.c.l.s4 1983009808
      %v216 = vunpack.c.0.s8 %v215
      %v217 = vlaneseq
      %v218 = vshrl.u32 %v217, 7
      %v219 = vsub.s32 %v216, %v218
      %v220 = vrot.slane %v206, %v219
      %v221 = vcombine.high %v213, %v213
      %222 = vrot.lane.b32.xlu0 %v213, 127
      %v223 = vpop.permute.xlu0 %222
      %224 = vrot.lane.b32.xlu0 %v221, 127
      %v225 = vpop.permute.xlu0 %224
      %226 = vrot.lane.b32.xlu0 %v220, 127
      %v227 = vpop.permute.xlu0 %226
      %vm228 = vcmask 1039360
      %v229 = vsel %vm228, %v223, %v225
      %v230 = vsel %vm228, %v225, %v227
      %vm231 = vcmask 31744
      %v233 = vsel %vm231, %v204, 0
      %vm235 = vcmask 1041408
      %v237 = vsel %vm235, %v229, 0
      %v240 = vsel %vm235, %v230, 0
      %v243 = vsel %vm235, %v227, 0
      %245 = vmatprep.subr.bf16.mxu0 %v240
      %246 = vmatpush1.bf16.msra.mxu0 %v237
      %247 = vmatprep.subr.bf16.mxu0 0
      %248 = vmatpush1.bf16.msra.mxu0 0
      %249 = vmatprep.subr.bf16.mxu0 0
      %250 = vmatpush1.bf16.msra.mxu0 0
      %251 = vmatprep.subr.bf16.mxu0 0
      %252 = vmatpush1.bf16.msra.mxu0 0
      %253 = vmatprep.subr.bf16.mxu0 0
      %254 = vmatpush1.bf16.msra.mxu0 0
      %255 = vmatprep.subr.bf16.mxu0 0
      %256 = vmatpush1.bf16.msra.mxu0 0
      %257 = vmatprep.subr.bf16.mxu0 0
      %258 = vmatpush1.bf16.msra.mxu0 0
      %259 = vmatprep.subr.bf16.mxu0 0
      %260 = vmatpush1.bf16.msra.mxu0 0
      %261 = vmatprep.subr.bf16.mxu0 0
      %262 = vmatpush1.bf16.msra.mxu0 0
      %263 = vmatprep.subr.bf16.mxu0 0
      %264 = vmatpush1.bf16.msra.mxu0 0
      %265 = vmatprep.subr.bf16.mxu0 0
      %266 = vmatpush1.bf16.msra.mxu0 0
      %267 = vmatprep.subr.bf16.mxu0 0
      %268 = vmatpush1.bf16.msra.mxu0 0
      %269 = vmatprep.subr.bf16.mxu0 0
      %270 = vmatpush1.bf16.msra.mxu0 0
      %271 = vmatprep.subr.bf16.mxu0 0
      %272 = vmatpush1.bf16.msra.mxu0 0
      %273 = vmatprep.subr.bf16.mxu0 0
      %274 = vmatpush1.bf16.msra.mxu0 0
      %275 = vmatprep.subr.bf16.mxu0 0
      %276 = vmatpush1.bf16.msra.mxu0 0
      %277 = vmatprep.mubr.bf16.mxu0 0
      %278 = vmatmul.mubr.bf16.gmra.mrb[0].mxu0 %v233
      %v279 = vpop.f32.mrb[0].mxu0
      %v280 = vadd.f32 0.0, %v279
      %v281 = vpop.f32.mrb[0].mxu0
      %v282 = vadd.f32 0.0, %v281
      %v283 = vpop.f32.mrb[0].mxu0
      %v284 = vpop.f32.mrb[0].mxu0
      %285 = vdwg.mxu0
      %286 = vmatprep.subr.bf16.mxu0 0
      %287 = vmatpush1.bf16.msra.mxu0 %v243
      %288 = vmatprep.subr.bf16.mxu0 0
      %289 = vmatpush1.bf16.msra.mxu0 0
      %290 = vmatprep.subr.bf16.mxu0 0
      %291 = vmatpush1.bf16.msra.mxu0 0
      %292 = vmatprep.subr.bf16.mxu0 0
      %293 = vmatpush1.bf16.msra.mxu0 0
      %294 = vmatprep.subr.bf16.mxu0 0
      %295 = vmatpush1.bf16.msra.mxu0 0
      %296 = vmatprep.subr.bf16.mxu0 0
      %297 = vmatpush1.bf16.msra.mxu0 0
      %298 = vmatprep.subr.bf16.mxu0 0
      %299 = vmatpush1.bf16.msra.mxu0 0
      %300 = vmatprep.subr.bf16.mxu0 0
      %301 = vmatpush1.bf16.msra.mxu0 0
      %302 = vmatprep.subr.bf16.mxu0 0
      %303 = vmatpush1.bf16.msra.mxu0 0
      %304 = vmatprep.subr.bf16.mxu0 0
      %305 = vmatpush1.bf16.msra.mxu0 0
      %306 = vmatprep.subr.bf16.mxu0 0
      %307 = vmatpush1.bf16.msra.mxu0 0
      %308 = vmatprep.subr.bf16.mxu0 0
      %309 = vmatpush1.bf16.msra.mxu0 0
      %310 = vmatprep.subr.bf16.mxu0 0
      %311 = vmatpush1.bf16.msra.mxu0 0
      %312 = vmatprep.subr.bf16.mxu0 0
      %313 = vmatpush1.bf16.msra.mxu0 0
      %314 = vmatprep.subr.bf16.mxu0 0
      %315 = vmatpush1.bf16.msra.mxu0 0
      %316 = vmatprep.subr.bf16.mxu0 0
      %317 = vmatpush1.bf16.msra.mxu0 0
      %318 = vmatprep.mubr.bf16.mxu0 0
      %319 = vmatmul.mubr.bf16.gmra.mrb[0].mxu0 %v233
      %v320 = vpop.f32.mrb[0].mxu0
      %v321 = vadd.f32 0.0, %v320
      %v322 = vpop.f32.mrb[0].mxu0
      %v323 = vpop.f32.mrb[0].mxu0
      %v324 = vpop.f32.mrb[0].mxu0
      %325 = vdwg.mxu0
      %v327 = vsel %vm231, %v202, 0
      %v330 = vsel %vm235, %v213, 0
      %v333 = vsel %vm235, %v221, 0
      %v336 = vsel %vm235, %v220, 0
      %338 = vmatprep.subr.bf16.mxu0 %v333
      %339 = vmatpush1.bf16.msra.mxu0 %v330
      %340 = vmatprep.subr.bf16.mxu0 0
      %341 = vmatpush1.bf16.msra.mxu0 0
      %342 = vmatprep.subr.bf16.mxu0 0
      %343 = vmatpush1.bf16.msra.mxu0 0
      %344 = vmatprep.subr.bf16.mxu0 0
      %345 = vmatpush1.bf16.msra.mxu0 0
      %346 = vmatprep.subr.bf16.mxu0 0
      %347 = vmatpush1.bf16.msra.mxu0 0
      %348 = vmatprep.subr.bf16.mxu0 0
      %349 = vmatpush1.bf16.msra.mxu0 0
      %350 = vmatprep.subr.bf16.mxu0 0
      %351 = vmatpush1.bf16.msra.mxu0 0
      %352 = vmatprep.subr.bf16.mxu0 0
      %353 = vmatpush1.bf16.msra.mxu0 0
      %354 = vmatprep.subr.bf16.mxu0 0
      %355 = vmatpush1.bf16.msra.mxu0 0
      %356 = vmatprep.subr.bf16.mxu0 0
      %357 = vmatpush1.bf16.msra.mxu0 0
      %358 = vmatprep.subr.bf16.mxu0 0
      %359 = vmatpush1.bf16.msra.mxu0 0
      %360 = vmatprep.subr.bf16.mxu0 0
      %361 = vmatpush1.bf16.msra.mxu0 0
      %362 = vmatprep.subr.bf16.mxu0 0
      %363 = vmatpush1.bf16.msra.mxu0 0
      %364 = vmatprep.subr.bf16.mxu0 0
      %365 = vmatpush1.bf16.msra.mxu0 0
      %366 = vmatprep.subr.bf16.mxu0 0
      %367 = vmatpush1.bf16.msra.mxu0 0
      %368 = vmatprep.subr.bf16.mxu0 0
      %369 = vmatpush1.bf16.msra.mxu0 0
      %370 = vmatprep.mubr.bf16.mxu0 0
      %371 = vmatmul.mubr.bf16.gmra.mrb[0].mxu0 %v327
      %v372 = vpop.f32.mrb[0].mxu0
      %v373 = vadd.f32 %v280, %v372
      %v374 = vpop.f32.mrb[0].mxu0
      %v375 = vadd.f32 %v282, %v374
      %v376 = vpop.f32.mrb[0].mxu0
      %v377 = vpop.f32.mrb[0].mxu0
      %378 = vdwg.mxu0
      %379 = vmatprep.subr.bf16.mxu0 0
      %380 = vmatpush1.bf16.msra.mxu0 %v336
      %381 = vmatprep.subr.bf16.mxu0 0
      %382 = vmatpush1.bf16.msra.mxu0 0
      %383 = vmatprep.subr.bf16.mxu0 0
      %384 = vmatpush1.bf16.msra.mxu0 0
      %385 = vmatprep.subr.bf16.mxu0 0
      %386 = vmatpush1.bf16.msra.mxu0 0
      %387 = vmatprep.subr.bf16.mxu0 0
      %388 = vmatpush1.bf16.msra.mxu0 0
      %389 = vmatprep.subr.bf16.mxu0 0
      %390 = vmatpush1.bf16.msra.mxu0 0
      %391 = vmatprep.subr.bf16.mxu0 0
      %392 = vmatpush1.bf16.msra.mxu0 0
      %393 = vmatprep.subr.bf16.mxu0 0
      %394 = vmatpush1.bf16.msra.mxu0 0
      %395 = vmatprep.subr.bf16.mxu0 0
      %396 = vmatpush1.bf16.msra.mxu0 0
      %397 = vmatprep.subr.bf16.mxu0 0
      %398 = vmatpush1.bf16.msra.mxu0 0
      %399 = vmatprep.subr.bf16.mxu0 0
      %400 = vmatpush1.bf16.msra.mxu0 0
      %401 = vmatprep.subr.bf16.mxu0 0
      %402 = vmatpush1.bf16.msra.mxu0 0
      %403 = vmatprep.subr.bf16.mxu0 0
      %404 = vmatpush1.bf16.msra.mxu0 0
      %405 = vmatprep.subr.bf16.mxu0 0
      %406 = vmatpush1.bf16.msra.mxu0 0
      %407 = vmatprep.subr.bf16.mxu0 0
      %408 = vmatpush1.bf16.msra.mxu0 0
      %409 = vmatprep.subr.bf16.mxu0 0
      %410 = vmatpush1.bf16.msra.mxu0 0
      %411 = vmatprep.mubr.bf16.mxu0 0
      %412 = vmatmul.mubr.bf16.gmra.mrb[0].mxu0 %v327
      %v413 = vpop.f32.mrb[0].mxu0
      %v414 = vadd.f32 %v321, %v413
      %v415 = vpop.f32.mrb[0].mxu0
      %v416 = vpop.f32.mrb[0].mxu0
      %v417 = vpop.f32.mrb[0].mxu0
      %418 = vdwg.mxu0
      %v419 = vld [vmem:[%s192] sm:$0x3f]
      %s420 = scalar_lea.vmem %s1, 8
      %v421 = vld [vmem:[%s420] sm:$0xf]
      %v423 = vcombine.high %v419, %v419
      %v425 = vunpack.c.l.s4 1983009808
      %v426 = vunpack.c.0.s8 %v425
      %v427 = vlaneseq
      %v428 = vshrl.u32 %v427, 7
      %v429 = vsub.s32 %v426, %v428
      %v430 = vrot.slane %v419, %v429
      %v432 = vunpack.c.l.s4 1983009808
      %v433 = vunpack.c.0.s8 %v432
      %v434 = vlaneseq
      %v435 = vshrl.u32 %v434, 7
      %v436 = vsub.s32 %v433, %v435
      %v437 = vrot.slane %v423, %v436
      %v438 = vcombine.high %v430, %v430
      %439 = vrot.lane.b32.xlu0 %v430, 126
      %v440 = vpop.permute.xlu0 %439
      %441 = vrot.lane.b32.xlu0 %v438, 126
      %v442 = vpop.permute.xlu0 %441
      %443 = vrot.lane.b32.xlu0 %v437, 126
      %v444 = vpop.permute.xlu0 %443
      %vm445 = vcmask 1031168
      %v446 = vsel %vm445, %v440, %v442
      %v447 = vsel %vm445, %v442, %v444
      %v449 = vsel %vm231, %v421, 0
      %v452 = vsel %vm235, %v446, 0
      %v455 = vsel %vm235, %v447, 0
      %v458 = vsel %vm235, %v444, 0
      %460 = vmatprep.subr.bf16.mxu0 %v455
      %461 = vmatpush1.bf16.msra.mxu0 %v452
      %462 = vmatprep.subr.bf16.mxu0 0
      %463 = vmatpush1.bf16.msra.mxu0 0
      %464 = vmatprep.subr.bf16.mxu0 0
      %465 = vmatpush1.bf16.msra.mxu0 0
      %466 = vmatprep.subr.bf16.mxu0 0
      %467 = vmatpush1.bf16.msra.mxu0 0
      %468 = vmatprep.subr.bf16.mxu0 0
      %469 = vmatpush1.bf16.msra.mxu0 0
      %470 = vmatprep.subr.bf16.mxu0 0
      %471 = vmatpush1.bf16.msra.mxu0 0
      %472 = vmatprep.subr.bf16.mxu0 0
      %473 = vmatpush1.bf16.msra.mxu0 0
      %474 = vmatprep.subr.bf16.mxu0 0
      %475 = vmatpush1.bf16.msra.mxu0 0
      %476 = vmatprep.subr.bf16.mxu0 0
      %477 = vmatpush1.bf16.msra.mxu0 0
      %478 = vmatprep.subr.bf16.mxu0 0
      %479 = vmatpush1.bf16.msra.mxu0 0
      %480 = vmatprep.subr.bf16.mxu0 0
      %481 = vmatpush1.bf16.msra.mxu0 0
      %482 = vmatprep.subr.bf16.mxu0 0
      %483 = vmatpush1.bf16.msra.mxu0 0
      %484 = vmatprep.subr.bf16.mxu0 0
      %485 = vmatpush1.bf16.msra.mxu0 0
      %486 = vmatprep.subr.bf16.mxu0 0
      %487 = vmatpush1.bf16.msra.mxu0 0
      %488 = vmatprep.subr.bf16.mxu0 0
      %489 = vmatpush1.bf16.msra.mxu0 0
      %490 = vmatprep.subr.bf16.mxu0 0
      %491 = vmatpush1.bf16.msra.mxu0 0
      %492 = vmatprep.mubr.bf16.mxu0 0
      %493 = vmatmul.mubr.bf16.gmra.mrb[0].mxu0 %v449
      %v494 = vpop.f32.mrb[0].mxu0
      %v495 = vadd.f32 0.0, %v494
      %v496 = vpop.f32.mrb[0].mxu0
      %v497 = vadd.f32 0.0, %v496
      %v498 = vpop.f32.mrb[0].mxu0
      %v499 = vpop.f32.mrb[0].mxu0
      %500 = vdwg.mxu0
      %501 = vmatprep.subr.bf16.mxu0 0
      %502 = vmatpush1.bf16.msra.mxu0 %v458
      %503 = vmatprep.subr.bf16.mxu0 0
      %504 = vmatpush1.bf16.msra.mxu0 0
      %505 = vmatprep.subr.bf16.mxu0 0
      %506 = vmatpush1.bf16.msra.mxu0 0
      %507 = vmatprep.subr.bf16.mxu0 0
      %508 = vmatpush1.bf16.msra.mxu0 0
      %509 = vmatprep.subr.bf16.mxu0 0
      %510 = vmatpush1.bf16.msra.mxu0 0
      %511 = vmatprep.subr.bf16.mxu0 0
      %512 = vmatpush1.bf16.msra.mxu0 0
      %513 = vmatprep.subr.bf16.mxu0 0
      %514 = vmatpush1.bf16.msra.mxu0 0
      %515 = vmatprep.subr.bf16.mxu0 0
      %516 = vmatpush1.bf16.msra.mxu0 0
      %517 = vmatprep.subr.bf16.mxu0 0
      %518 = vmatpush1.bf16.msra.mxu0 0
      %519 = vmatprep.subr.bf16.mxu0 0
      %520 = vmatpush1.bf16.msra.mxu0 0
      %521 = vmatprep.subr.bf16.mxu0 0
      %522 = vmatpush1.bf16.msra.mxu0 0
      %523 = vmatprep.subr.bf16.mxu0 0
      %524 = vmatpush1.bf16.msra.mxu0 0
      %525 = vmatprep.subr.bf16.mxu0 0
      %526 = vmatpush1.bf16.msra.mxu0 0
      %527 = vmatprep.subr.bf16.mxu0 0
      %528 = vmatpush1.bf16.msra.mxu0 0
      %529 = vmatprep.subr.bf16.mxu0 0
      %530 = vmatpush1.bf16.msra.mxu0 0
      %531 = vmatprep.subr.bf16.mxu0 0
      %532 = vmatpush1.bf16.msra.mxu0 0
      %533 = vmatprep.mubr.bf16.mxu0 0
      %534 = vmatmul.mubr.bf16.gmra.mrb[0].mxu0 %v449
      %v535 = vpop.f32.mrb[0].mxu0
      %v536 = vadd.f32 0.0, %v535
      %v537 = vpop.f32.mrb[0].mxu0
      %v538 = vpop.f32.mrb[0].mxu0
      %v539 = vpop.f32.mrb[0].mxu0
      %540 = vdwg.mxu0
      %v541 = vadd.f32 %v373, %v495
      %v542 = vadd.f32 %v375, %v497
      %v543 = vadd.f32 %v414, %v536
      %v544 = vld [vmem:[%s192] sm:$0x3f]
      %s545 = scalar_lea.vmem %s1, 12
      %v546 = vld [vmem:[%s545] sm:$0xf]
      %v548 = vcombine.high %v544, %v544
      %v550 = vunpack.c.l.s4 1983009808
      %v551 = vunpack.c.0.s8 %v550
      %v552 = vlaneseq
      %v553 = vshrl.u32 %v552, 7
      %v554 = vsub.s32 %v551, %v553
      %v555 = vrot.slane %v544, %v554
      %v557 = vunpack.c.l.s4 1983009808
      %v558 = vunpack.c.0.s8 %v557
      %v559 = vlaneseq
      %v560 = vshrl.u32 %v559, 7
      %v561 = vsub.s32 %v558, %v560
      %v562 = vrot.slane %v548, %v561
      %v563 = vcombine.high %v555, %v555
      %564 = vrot.lane.b32.xlu0 %v555, 110
      %v565 = vpop.permute.xlu0 %564
      %566 = vrot.lane.b32.xlu0 %v563, 110
      %v567 = vpop.permute.xlu0 %566
      %568 = vrot.lane.b32.xlu0 %v562, 110
      %v569 = vpop.permute.xlu0 %568
      %vm570 = vcmask 900096
      %v571 = vsel %vm570, %v565, %v567
      %v572 = vsel %vm570, %v567, %v569
      %v574 = vsel %vm231, %v546, 0
      %v577 = vsel %vm235, %v571, 0
      %v580 = vsel %vm235, %v572, 0
      %v583 = vsel %vm235, %v569, 0
      %585 = vmatprep.subr.bf16.mxu0 %v580
      %586 = vmatpush1.bf16.msra.mxu0 %v577
      %587 = vmatprep.subr.bf16.mxu0 0
      %588 = vmatpush1.bf16.msra.mxu0 0
      %589 = vmatprep.subr.bf16.mxu0 0
      %590 = vmatpush1.bf16.msra.mxu0 0
      %591 = vmatprep.subr.bf16.mxu0 0
      %592 = vmatpush1.bf16.msra.mxu0 0
      %593 = vmatprep.subr.bf16.mxu0 0
      %594 = vmatpush1.bf16.msra.mxu0 0
      %595 = vmatprep.subr.bf16.mxu0 0
      %596 = vmatpush1.bf16.msra.mxu0 0
      %597 = vmatprep.subr.bf16.mxu0 0
      %598 = vmatpush1.bf16.msra.mxu0 0
      %599 = vmatprep.subr.bf16.mxu0 0
      %600 = vmatpush1.bf16.msra.mxu0 0
      %601 = vmatprep.subr.bf16.mxu0 0
      %602 = vmatpush1.bf16.msra.mxu0 0
      %603 = vmatprep.subr.bf16.mxu0 0
      %604 = vmatpush1.bf16.msra.mxu0 0
      %605 = vmatprep.subr.bf16.mxu0 0
      %606 = vmatpush1.bf16.msra.mxu0 0
      %607 = vmatprep.subr.bf16.mxu0 0
      %608 = vmatpush1.bf16.msra.mxu0 0
      %609 = vmatprep.subr.bf16.mxu0 0
      %610 = vmatpush1.bf16.msra.mxu0 0
      %611 = vmatprep.subr.bf16.mxu0 0
      %612 = vmatpush1.bf16.msra.mxu0 0
      %613 = vmatprep.subr.bf16.mxu0 0
      %614 = vmatpush1.bf16.msra.mxu0 0
      %615 = vmatprep.subr.bf16.mxu0 0
      %616 = vmatpush1.bf16.msra.mxu0 0
      %617 = vmatprep.mubr.bf16.mxu0 0
      %618 = vmatmul.mubr.bf16.gmra.mrb[0].mxu0 %v574
      %v619 = vpop.f32.mrb[0].mxu0
      %v620 = vadd.f32 0.0, %v619
      %v621 = vpop.f32.mrb[0].mxu0
      %v622 = vadd.f32 0.0, %v621
      %v623 = vpop.f32.mrb[0].mxu0
      %v624 = vpop.f32.mrb[0].mxu0
      %625 = vdwg.mxu0
      %626 = vmatprep.subr.bf16.mxu0 0
      %627 = vmatpush1.bf16.msra.mxu0 %v583
      %628 = vmatprep.subr.bf16.mxu0 0
      %629 = vmatpush1.bf16.msra.mxu0 0
      %630 = vmatprep.subr.bf16.mxu0 0
      %631 = vmatpush1.bf16.msra.mxu0 0
      %632 = vmatprep.subr.bf16.mxu0 0
      %633 = vmatpush1.bf16.msra.mxu0 0
      %634 = vmatprep.subr.bf16.mxu0 0
      %635 = vmatpush1.bf16.msra.mxu0 0
      %636 = vmatprep.subr.bf16.mxu0 0
      %637 = vmatpush1.bf16.msra.mxu0 0
      %638 = vmatprep.subr.bf16.mxu0 0
      %639 = vmatpush1.bf16.msra.mxu0 0
      %640 = vmatprep.subr.bf16.mxu0 0
      %641 = vmatpush1.bf16.msra.mxu0 0
      %642 = vmatprep.subr.bf16.mxu0 0
      %643 = vmatpush1.bf16.msra.mxu0 0
      %644 = vmatprep.subr.bf16.mxu0 0
      %645 = vmatpush1.bf16.msra.mxu0 0
      %646 = vmatprep.subr.bf16.mxu0 0
      %647 = vmatpush1.bf16.msra.mxu0 0
      %648 = vmatprep.subr.bf16.mxu0 0
      %649 = vmatpush1.bf16.msra.mxu0 0
      %650 = vmatprep.subr.bf16.mxu0 0
      %651 = vmatpush1.bf16.msra.mxu0 0
      %652 = vmatprep.subr.bf16.mxu0 0
      %653 = vmatpush1.bf16.msra.mxu0 0
      %654 = vmatprep.subr.bf16.mxu0 0
      %655 = vmatpush1.bf16.msra.mxu0 0
      %656 = vmatprep.subr.bf16.mxu0 0
      %657 = vmatpush1.bf16.msra.mxu0 0
      %658 = vmatprep.mubr.bf16.mxu0 0
      %659 = vmatmul.mubr.bf16.gmra.mrb[0].mxu0 %v574
      %v660 = vpop.f32.mrb[0].mxu0
      %v661 = vadd.f32 0.0, %v660
      %v662 = vpop.f32.mrb[0].mxu0
      %v663 = vpop.f32.mrb[0].mxu0
      %v664 = vpop.f32.mrb[0].mxu0
      %665 = vdwg.mxu0
      %v666 = vadd.f32 %v541, %v620
      %v667 = vadd.f32 %v542, %v622
      %v668 = vadd.f32 %v543, %v661
      %v669 = vld [vmem:[%s192] sm:$0x3f]
      %s670 = scalar_lea.vmem %s1, 16
      %v671 = vld [vmem:[%s670] sm:$0xf]
      %v673 = vcombine.high %v669, %v669
      %v675 = vunpack.c.l.s4 1983009808
      %v676 = vunpack.c.0.s8 %v675
      %v677 = vlaneseq
      %v678 = vshrl.u32 %v677, 7
      %v679 = vsub.s32 %v676, %v678
      %v680 = vrot.slane %v669, %v679
      %v682 = vunpack.c.l.s4 1983009808
      %v683 = vunpack.c.0.s8 %v682
      %v684 = vlaneseq
      %v685 = vshrl.u32 %v684, 7
      %v686 = vsub.s32 %v683, %v685
      %v687 = vrot.slane %v673, %v686
      %v688 = vcombine.high %v680, %v680
      %689 = vrot.lane.b32.xlu0 %v680, 109
      %v690 = vpop.permute.xlu0 %689
      %691 = vrot.lane.b32.xlu0 %v688, 109
      %v692 = vpop.permute.xlu0 %691
      %693 = vrot.lane.b32.xlu0 %v687, 109
      %v694 = vpop.permute.xlu0 %693
      %vm695 = vcmask 891904
      %v696 = vsel %vm695, %v690, %v692
      %v697 = vsel %vm695, %v692, %v694
      %v699 = vsel %vm231, %v671, 0
      %v702 = vsel %vm235, %v696, 0
      %v705 = vsel %vm235, %v697, 0
      %v708 = vsel %vm235, %v694, 0
      %710 = vmatprep.subr.bf16.mxu0 %v705
      %711 = vmatpush1.bf16.msra.mxu0 %v702
      %712 = vmatprep.subr.bf16.mxu0 0
      %713 = vmatpush1.bf16.msra.mxu0 0
      %714 = vmatprep.subr.bf16.mxu0 0
      %715 = vmatpush1.bf16.msra.mxu0 0
      %716 = vmatprep.subr.bf16.mxu0 0
      %717 = vmatpush1.bf16.msra.mxu0 0
      %718 = vmatprep.subr.bf16.mxu0 0
      %719 = vmatpush1.bf16.msra.mxu0 0
      %720 = vmatprep.subr.bf16.mxu0 0
      %721 = vmatpush1.bf16.msra.mxu0 0
      %722 = vmatprep.subr.bf16.mxu0 0
      %723 = vmatpush1.bf16.msra.mxu0 0
      %724 = vmatprep.subr.bf16.mxu0 0
      %725 = vmatpush1.bf16.msra.mxu0 0
      %726 = vmatprep.subr.bf16.mxu0 0
      %727 = vmatpush1.bf16.msra.mxu0 0
      %728 = vmatprep.subr.bf16.mxu0 0
      %729 = vmatpush1.bf16.msra.mxu0 0
      %730 = vmatprep.subr.bf16.mxu0 0
      %731 = vmatpush1.bf16.msra.mxu0 0
      %732 = vmatprep.subr.bf16.mxu0 0
      %733 = vmatpush1.bf16.msra.mxu0 0
      %734 = vmatprep.subr.bf16.mxu0 0
      %735 = vmatpush1.bf16.msra.mxu0 0
      %736 = vmatprep.subr.bf16.mxu0 0
      %737 = vmatpush1.bf16.msra.mxu0 0
      %738 = vmatprep.subr.bf16.mxu0 0
      %739 = vmatpush1.bf16.msra.mxu0 0
      %740 = vmatprep.subr.bf16.mxu0 0
      %741 = vmatpush1.bf16.msra.mxu0 0
      %742 = vmatprep.mubr.bf16.mxu0 0
      %743 = vmatmul.mubr.bf16.gmra.mrb[0].mxu0 %v699
      %v744 = vpop.f32.mrb[0].mxu0
      %v745 = vadd.f32 0.0, %v744
      %v746 = vpop.f32.mrb[0].mxu0
      %v747 = vadd.f32 0.0, %v746
      %v748 = vpop.f32.mrb[0].mxu0
      %v749 = vpop.f32.mrb[0].mxu0
      %750 = vdwg.mxu0
      %751 = vmatprep.subr.bf16.mxu0 0
      %752 = vmatpush1.bf16.msra.mxu0 %v708
      %753 = vmatprep.subr.bf16.mxu0 0
      %754 = vmatpush1.bf16.msra.mxu0 0
      %755 = vmatprep.subr.bf16.mxu0 0
      %756 = vmatpush1.bf16.msra.mxu0 0
      %757 = vmatprep.subr.bf16.mxu0 0
      %758 = vmatpush1.bf16.msra.mxu0 0
      %759 = vmatprep.subr.bf16.mxu0 0
      %760 = vmatpush1.bf16.msra.mxu0 0
      %761 = vmatprep.subr.bf16.mxu0 0
      %762 = vmatpush1.bf16.msra.mxu0 0
      %763 = vmatprep.subr.bf16.mxu0 0
      %764 = vmatpush1.bf16.msra.mxu0 0
      %765 = vmatprep.subr.bf16.mxu0 0
      %766 = vmatpush1.bf16.msra.mxu0 0
      %767 = vmatprep.subr.bf16.mxu0 0
      %768 = vmatpush1.bf16.msra.mxu0 0
      %769 = vmatprep.subr.bf16.mxu0 0
      %770 = vmatpush1.bf16.msra.mxu0 0
      %771 = vmatprep.subr.bf16.mxu0 0
      %772 = vmatpush1.bf16.msra.mxu0 0
      %773 = vmatprep.subr.bf16.mxu0 0
      %774 = vmatpush1.bf16.msra.mxu0 0
      %775 = vmatprep.subr.bf16.mxu0 0
      %776 = vmatpush1.bf16.msra.mxu0 0
      %777 = vmatprep.subr.bf16.mxu0 0
      %778 = vmatpush1.bf16.msra.mxu0 0
      %779 = vmatprep.subr.bf16.mxu0 0
      %780 = vmatpush1.bf16.msra.mxu0 0
      %781 = vmatprep.subr.bf16.mxu0 0
      %782 = vmatpush1.bf16.msra.mxu0 0
      %783 = vmatprep.mubr.bf16.mxu0 0
      %784 = vmatmul.mubr.bf16.gmra.mrb[0].mxu0 %v699
      %v785 = vpop.f32.mrb[0].mxu0
      %v786 = vadd.f32 0.0, %v785
      %v787 = vpop.f32.mrb[0].mxu0
      %v788 = vpop.f32.mrb[0].mxu0
      %v789 = vpop.f32.mrb[0].mxu0
      %790 = vdwg.mxu0
      %v791 = vadd.f32 %v666, %v745
      %v792 = vadd.f32 %v667, %v747
      %v793 = vadd.f32 %v668, %v786
      %v794 = vld [vmem:[%s192] sm:$0x3f]
      %s795 = scalar_lea.vmem %s1, 20
      %v796 = vld [vmem:[%s795] sm:$0xf]
      %v798 = vcombine.high %v794, %v794
      %v800 = vunpack.c.l.s4 1983009808
      %v801 = vunpack.c.0.s8 %v800
      %v802 = vlaneseq
      %v803 = vshrl.u32 %v802, 7
      %v804 = vsub.s32 %v801, %v803
      %v805 = vrot.slane %v794, %v804
      %v807 = vunpack.c.l.s4 1983009808
      %v808 = vunpack.c.0.s8 %v807
      %v809 = vlaneseq
      %v810 = vshrl.u32 %v809, 7
      %v811 = vsub.s32 %v808, %v810
      %v812 = vrot.slane %v798, %v811
      %v813 = vcombine.high %v805, %v805
      %814 = vrot.lane.b32.xlu0 %v805, 108
      %v815 = vpop.permute.xlu0 %814
      %816 = vrot.lane.b32.xlu0 %v813, 108
      %v817 = vpop.permute.xlu0 %816
      %818 = vrot.lane.b32.xlu0 %v812, 108
      %v819 = vpop.permute.xlu0 %818
      %vm820 = vcmask 883712
      %v821 = vsel %vm820, %v815, %v817
      %v822 = vsel %vm820, %v817, %v819
      %v824 = vsel %vm231, %v796, 0
      %v827 = vsel %vm235, %v821, 0
      %v830 = vsel %vm235, %v822, 0
      %v833 = vsel %vm235, %v819, 0
      %835 = vmatprep.subr.bf16.mxu0 %v830
      %836 = vmatpush1.bf16.msra.mxu0 %v827
      %837 = vmatprep.subr.bf16.mxu0 0
      %838 = vmatpush1.bf16.msra.mxu0 0
      %839 = vmatprep.subr.bf16.mxu0 0
      %840 = vmatpush1.bf16.msra.mxu0 0
      %841 = vmatprep.subr.bf16.mxu0 0
      %842 = vmatpush1.bf16.msra.mxu0 0
      %843 = vmatprep.subr.bf16.mxu0 0
      %844 = vmatpush1.bf16.msra.mxu0 0
      %845 = vmatprep.subr.bf16.mxu0 0
      %846 = vmatpush1.bf16.msra.mxu0 0
      %847 = vmatprep.subr.bf16.mxu0 0
      %848 = vmatpush1.bf16.msra.mxu0 0
      %849 = vmatprep.subr.bf16.mxu0 0
      %850 = vmatpush1.bf16.msra.mxu0 0
      %851 = vmatprep.subr.bf16.mxu0 0
      %852 = vmatpush1.bf16.msra.mxu0 0
      %853 = vmatprep.subr.bf16.mxu0 0
      %854 = vmatpush1.bf16.msra.mxu0 0
      %855 = vmatprep.subr.bf16.mxu0 0
      %856 = vmatpush1.bf16.msra.mxu0 0
      %857 = vmatprep.subr.bf16.mxu0 0
      %858 = vmatpush1.bf16.msra.mxu0 0
      %859 = vmatprep.subr.bf16.mxu0 0
      %860 = vmatpush1.bf16.msra.mxu0 0
      %861 = vmatprep.subr.bf16.mxu0 0
      %862 = vmatpush1.bf16.msra.mxu0 0
      %863 = vmatprep.subr.bf16.mxu0 0
      %864 = vmatpush1.bf16.msra.mxu0 0
      %865 = vmatprep.subr.bf16.mxu0 0
      %866 = vmatpush1.bf16.msra.mxu0 0
      %867 = vmatprep.mubr.bf16.mxu0 0
      %868 = vmatmul.mubr.bf16.gmra.mrb[0].mxu0 %v824
      %v869 = vpop.f32.mrb[0].mxu0
      %v870 = vadd.f32 0.0, %v869
      %v871 = vpop.f32.mrb[0].mxu0
      %v872 = vadd.f32 0.0, %v871
      %v873 = vpop.f32.mrb[0].mxu0
      %v874 = vpop.f32.mrb[0].mxu0
      %875 = vdwg.mxu0
      %876 = vmatprep.subr.bf16.mxu0 0
      %877 = vmatpush1.bf16.msra.mxu0 %v833
      %878 = vmatprep.subr.bf16.mxu0 0
      %879 = vmatpush1.bf16.msra.mxu0 0
      %880 = vmatprep.subr.bf16.mxu0 0
      %881 = vmatpush1.bf16.msra.mxu0 0
      %882 = vmatprep.subr.bf16.mxu0 0
      %883 = vmatpush1.bf16.msra.mxu0 0
      %884 = vmatprep.subr.bf16.mxu0 0
      %885 = vmatpush1.bf16.msra.mxu0 0
      %886 = vmatprep.subr.bf16.mxu0 0
      %887 = vmatpush1.bf16.msra.mxu0 0
      %888 = vmatprep.subr.bf16.mxu0 0
      %889 = vmatpush1.bf16.msra.mxu0 0
      %890 = vmatprep.subr.bf16.mxu0 0
      %891 = vmatpush1.bf16.msra.mxu0 0
      %892 = vmatprep.subr.bf16.mxu0 0
      %893 = vmatpush1.bf16.msra.mxu0 0
      %894 = vmatprep.subr.bf16.mxu0 0
      %895 = vmatpush1.bf16.msra.mxu0 0
      %896 = vmatprep.subr.bf16.mxu0 0
      %897 = vmatpush1.bf16.msra.mxu0 0
      %898 = vmatprep.subr.bf16.mxu0 0
      %899 = vmatpush1.bf16.msra.mxu0 0
      %900 = vmatprep.subr.bf16.mxu0 0
      %901 = vmatpush1.bf16.msra.mxu0 0
      %902 = vmatprep.subr.bf16.mxu0 0
      %903 = vmatpush1.bf16.msra.mxu0 0
      %904 = vmatprep.subr.bf16.mxu0 0
      %905 = vmatpush1.bf16.msra.mxu0 0
      %906 = vmatprep.subr.bf16.mxu0 0
      %907 = vmatpush1.bf16.msra.mxu0 0
      %908 = vmatprep.mubr.bf16.mxu0 0
      %909 = vmatmul.mubr.bf16.gmra.mrb[0].mxu0 %v824
      %v910 = vpop.f32.mrb[0].mxu0
      %v911 = vadd.f32 0.0, %v910
      %v912 = vpop.f32.mrb[0].mxu0
      %v913 = vpop.f32.mrb[0].mxu0
      %v914 = vpop.f32.mrb[0].mxu0
      %915 = vdwg.mxu0
      %v916 = vadd.f32 %v791, %v870
      %v917 = vadd.f32 %v792, %v872
      %v918 = vadd.f32 %v793, %v911
      %v919 = vld [vmem:[%s192] sm:$0x3f]
      %s920 = scalar_lea.vmem %s1, 24
      %v921 = vld [vmem:[%s920] sm:$0xf]
      %v923 = vcombine.high %v919, %v919
      %v925 = vunpack.c.l.s4 1983009808
      %v926 = vunpack.c.0.s8 %v925
      %v927 = vlaneseq
      %v928 = vshrl.u32 %v927, 7
      %v929 = vsub.s32 %v926, %v928
      %v930 = vrot.slane %v919, %v929
      %v932 = vunpack.c.l.s4 1983009808
      %v933 = vunpack.c.0.s8 %v932
      %v934 = vlaneseq
      %v935 = vshrl.u32 %v934, 7
      %v936 = vsub.s32 %v933, %v935
      %v937 = vrot.slane %v923, %v936
      %v938 = vcombine.high %v930, %v930
      %939 = vrot.lane.b32.xlu0 %v930, 92
      %v940 = vpop.permute.xlu0 %939
      %941 = vrot.lane.b32.xlu0 %v938, 92
      %v942 = vpop.permute.xlu0 %941
      %943 = vrot.lane.b32.xlu0 %v937, 92
      %v944 = vpop.permute.xlu0 %943
      %vm945 = vcmask 752640
      %v946 = vsel %vm945, %v940, %v942
      %v947 = vsel %vm945, %v942, %v944
      %v949 = vsel %vm231, %v921, 0
      %v952 = vsel %vm235, %v946, 0
      %v955 = vsel %vm235, %v947, 0
      %v958 = vsel %vm235, %v944, 0
      %960 = vmatprep.subr.bf16.mxu0 %v955
      %961 = vmatpush1.bf16.msra.mxu0 %v952
      %962 = vmatprep.subr.bf16.mxu0 0
      %963 = vmatpush1.bf16.msra.mxu0 0
      %964 = vmatprep.subr.bf16.mxu0 0
      %965 = vmatpush1.bf16.msra.mxu0 0
      %966 = vmatprep.subr.bf16.mxu0 0
      %967 = vmatpush1.bf16.msra.mxu0 0
      %968 = vmatprep.subr.bf16.mxu0 0
      %969 = vmatpush1.bf16.msra.mxu0 0
      %970 = vmatprep.subr.bf16.mxu0 0
      %971 = vmatpush1.bf16.msra.mxu0 0
      %972 = vmatprep.subr.bf16.mxu0 0
      %973 = vmatpush1.bf16.msra.mxu0 0
      %974 = vmatprep.subr.bf16.mxu0 0
      %975 = vmatpush1.bf16.msra.mxu0 0
      %976 = vmatprep.subr.bf16.mxu0 0
      %977 = vmatpush1.bf16.msra.mxu0 0
      %978 = vmatprep.subr.bf16.mxu0 0
      %979 = vmatpush1.bf16.msra.mxu0 0
      %980 = vmatprep.subr.bf16.mxu0 0
      %981 = vmatpush1.bf16.msra.mxu0 0
      %982 = vmatprep.subr.bf16.mxu0 0
      %983 = vmatpush1.bf16.msra.mxu0 0
      %984 = vmatprep.subr.bf16.mxu0 0
      %985 = vmatpush1.bf16.msra.mxu0 0
      %986 = vmatprep.subr.bf16.mxu0 0
      %987 = vmatpush1.bf16.msra.mxu0 0
      %988 = vmatprep.subr.bf16.mxu0 0
      %989 = vmatpush1.bf16.msra.mxu0 0
      %990 = vmatprep.subr.bf16.mxu0 0
      %991 = vmatpush1.bf16.msra.mxu0 0
      %992 = vmatprep.mubr.bf16.mxu0 0
      %993 = vmatmul.mubr.bf16.gmra.mrb[0].mxu0 %v949
      %v994 = vpop.f32.mrb[0].mxu0
      %v995 = vadd.f32 0.0, %v994
      %v996 = vpop.f32.mrb[0].mxu0
      %v997 = vadd.f32 0.0, %v996
      %v998 = vpop.f32.mrb[0].mxu0
      %v999 = vpop.f32.mrb[0].mxu0
      %1000 = vdwg.mxu0
      %1001 = vmatprep.subr.bf16.mxu0 0
      %1002 = vmatpush1.bf16.msra.mxu0 %v958
      %1003 = vmatprep.subr.bf16.mxu0 0
      %1004 = vmatpush1.bf16.msra.mxu0 0
      %1005 = vmatprep.subr.bf16.mxu0 0
      %1006 = vmatpush1.bf16.msra.mxu0 0
      %1007 = vmatprep.subr.bf16.mxu0 0
      %1008 = vmatpush1.bf16.msra.mxu0 0
      %1009 = vmatprep.subr.bf16.mxu0 0
      %1010 = vmatpush1.bf16.msra.mxu0 0
      %1011 = vmatprep.subr.bf16.mxu0 0
      %1012 = vmatpush1.bf16.msra.mxu0 0
      %1013 = vmatprep.subr.bf16.mxu0 0
      %1014 = vmatpush1.bf16.msra.mxu0 0
      %1015 = vmatprep.subr.bf16.mxu0 0
      %1016 = vmatpush1.bf16.msra.mxu0 0
      %1017 = vmatprep.subr.bf16.mxu0 0
      %1018 = vmatpush1.bf16.msra.mxu0 0
      %1019 = vmatprep.subr.bf16.mxu0 0
      %1020 = vmatpush1.bf16.msra.mxu0 0
      %1021 = vmatprep.subr.bf16.mxu0 0
      %1022 = vmatpush1.bf16.msra.mxu0 0
      %1023 = vmatprep.subr.bf16.mxu0 0
      %1024 = vmatpush1.bf16.msra.mxu0 0
      %1025 = vmatprep.subr.bf16.mxu0 0
      %1026 = vmatpush1.bf16.msra.mxu0 0
      %1027 = vmatprep.subr.bf16.mxu0 0
      %1028 = vmatpush1.bf16.msra.mxu0 0
      %1029 = vmatprep.subr.bf16.mxu0 0
      %1030 = vmatpush1.bf16.msra.mxu0 0
      %1031 = vmatprep.subr.bf16.mxu0 0
      %1032 = vmatpush1.bf16.msra.mxu0 0
      %1033 = vmatprep.mubr.bf16.mxu0 0
      %1034 = vmatmul.mubr.bf16.gmra.mrb[0].mxu0 %v949
      %v1035 = vpop.f32.mrb[0].mxu0
      %v1036 = vadd.f32 0.0, %v1035
      %v1037 = vpop.f32.mrb[0].mxu0
      %v1038 = vpop.f32.mrb[0].mxu0
      %v1039 = vpop.f32.mrb[0].mxu0
      %1040 = vdwg.mxu0
      %v1041 = vadd.f32 %v916, %v995
      %v1042 = vadd.f32 %v917, %v997
      %v1043 = vadd.f32 %v918, %v1036
      %v1044 = vld [vmem:[%s192] sm:$0x3f]
      %s1045 = scalar_lea.vmem %s1, 28
      %v1046 = vld [vmem:[%s1045] sm:$0xf]
      %v1048 = vcombine.high %v1044, %v1044
      %v1050 = vunpack.c.l.s4 1983009808
      %v1051 = vunpack.c.0.s8 %v1050
      %v1052 = vlaneseq
      %v1053 = vshrl.u32 %v1052, 7
      %v1054 = vsub.s32 %v1051, %v1053
      %v1055 = vrot.slane %v1044, %v1054
      %v1057 = vunpack.c.l.s4 1983009808
      %v1058 = vunpack.c.0.s8 %v1057
      %v1059 = vlaneseq
      %v1060 = vshrl.u32 %v1059, 7
      %v1061 = vsub.s32 %v1058, %v1060
      %v1062 = vrot.slane %v1048, %v1061
      %v1063 = vcombine.high %v1055, %v1055
      %1064 = vrot.lane.b32.xlu0 %v1055, 91
      %v1065 = vpop.permute.xlu0 %1064
      %1066 = vrot.lane.b32.xlu0 %v1063, 91
      %v1067 = vpop.permute.xlu0 %1066
      %1068 = vrot.lane.b32.xlu0 %v1062, 91
      %v1069 = vpop.permute.xlu0 %1068
      %vm1070 = vcmask 744448
      %v1071 = vsel %vm1070, %v1065, %v1067
      %v1072 = vsel %vm1070, %v1067, %v1069
      %v1074 = vsel %vm231, %v1046, 0
      %v1077 = vsel %vm235, %v1071, 0
      %v1080 = vsel %vm235, %v1072, 0
      %v1083 = vsel %vm235, %v1069, 0
      %1085 = vmatprep.subr.bf16.mxu0 %v1080
      %1086 = vmatpush1.bf16.msra.mxu0 %v1077
      %1087 = vmatprep.subr.bf16.mxu0 0
      %1088 = vmatpush1.bf16.msra.mxu0 0
      %1089 = vmatprep.subr.bf16.mxu0 0
      %1090 = vmatpush1.bf16.msra.mxu0 0
      %1091 = vmatprep.subr.bf16.mxu0 0
      %1092 = vmatpush1.bf16.msra.mxu0 0
      %1093 = vmatprep.subr.bf16.mxu0 0
      %1094 = vmatpush1.bf16.msra.mxu0 0
      %1095 = vmatprep.subr.bf16.mxu0 0
      %1096 = vmatpush1.bf16.msra.mxu0 0
      %1097 = vmatprep.subr.bf16.mxu0 0
      %1098 = vmatpush1.bf16.msra.mxu0 0
      %1099 = vmatprep.subr.bf16.mxu0 0
      %1100 = vmatpush1.bf16.msra.mxu0 0
      %1101 = vmatprep.subr.bf16.mxu0 0
      %1102 = vmatpush1.bf16.msra.mxu0 0
      %1103 = vmatprep.subr.bf16.mxu0 0
      %1104 = vmatpush1.bf16.msra.mxu0 0
      %1105 = vmatprep.subr.bf16.mxu0 0
      %1106 = vmatpush1.bf16.msra.mxu0 0
      %1107 = vmatprep.subr.bf16.mxu0 0
      %1108 = vmatpush1.bf16.msra.mxu0 0
      %1109 = vmatprep.subr.bf16.mxu0 0
      %1110 = vmatpush1.bf16.msra.mxu0 0
      %1111 = vmatprep.subr.bf16.mxu0 0
      %1112 = vmatpush1.bf16.msra.mxu0 0
      %1113 = vmatprep.subr.bf16.mxu0 0
      %1114 = vmatpush1.bf16.msra.mxu0 0
      %1115 = vmatprep.subr.bf16.mxu0 0
      %1116 = vmatpush1.bf16.msra.mxu0 0
      %1117 = vmatprep.mubr.bf16.mxu0 0
      %1118 = vmatmul.mubr.bf16.gmra.mrb[0].mxu0 %v1074
      %v1119 = vpop.f32.mrb[0].mxu0
      %v1120 = vadd.f32 0.0, %v1119
      %v1121 = vpop.f32.mrb[0].mxu0
      %v1122 = vadd.f32 0.0, %v1121
      %v1123 = vpop.f32.mrb[0].mxu0
      %v1124 = vpop.f32.mrb[0].mxu0
      %1125 = vdwg.mxu0
      %1126 = vmatprep.subr.bf16.mxu0 0
      %1127 = vmatpush1.bf16.msra.mxu0 %v1083
      %1128 = vmatprep.subr.bf16.mxu0 0
      %1129 = vmatpush1.bf16.msra.mxu0 0
      %1130 = vmatprep.subr.bf16.mxu0 0
      %1131 = vmatpush1.bf16.msra.mxu0 0
      %1132 = vmatprep.subr.bf16.mxu0 0
      %1133 = vmatpush1.bf16.msra.mxu0 0
      %1134 = vmatprep.subr.bf16.mxu0 0
      %1135 = vmatpush1.bf16.msra.mxu0 0
      %1136 = vmatprep.subr.bf16.mxu0 0
      %1137 = vmatpush1.bf16.msra.mxu0 0
      %1138 = vmatprep.subr.bf16.mxu0 0
      %1139 = vmatpush1.bf16.msra.mxu0 0
      %1140 = vmatprep.subr.bf16.mxu0 0
      %1141 = vmatpush1.bf16.msra.mxu0 0
      %1142 = vmatprep.subr.bf16.mxu0 0
      %1143 = vmatpush1.bf16.msra.mxu0 0
      %1144 = vmatprep.subr.bf16.mxu0 0
      %1145 = vmatpush1.bf16.msra.mxu0 0
      %1146 = vmatprep.subr.bf16.mxu0 0
      %1147 = vmatpush1.bf16.msra.mxu0 0
      %1148 = vmatprep.subr.bf16.mxu0 0
      %1149 = vmatpush1.bf16.msra.mxu0 0
      %1150 = vmatprep.subr.bf16.mxu0 0
      %1151 = vmatpush1.bf16.msra.mxu0 0
      %1152 = vmatprep.subr.bf16.mxu0 0
      %1153 = vmatpush1.bf16.msra.mxu0 0
      %1154 = vmatprep.subr.bf16.mxu0 0
      %1155 = vmatpush1.bf16.msra.mxu0 0
      %1156 = vmatprep.subr.bf16.mxu0 0
      %1157 = vmatpush1.bf16.msra.mxu0 0
      %1158 = vmatprep.mubr.bf16.mxu0 0
      %1159 = vmatmul.mubr.bf16.gmra.mrb[0].mxu0 %v1074
      %v1160 = vpop.f32.mrb[0].mxu0
      %v1161 = vadd.f32 0.0, %v1160
      %v1162 = vpop.f32.mrb[0].mxu0
      %v1163 = vpop.f32.mrb[0].mxu0
      %v1164 = vpop.f32.mrb[0].mxu0
      %1165 = vdwg.mxu0
      %v1166 = vadd.f32 %v1041, %v1120
      %v1167 = vadd.f32 %v1042, %v1122
      %v1168 = vadd.f32 %v1043, %v1161
      %v1169 = vld [vmem:[%s192] sm:$0x3f]
      %s1170 = scalar_lea.vmem %s1, 32
      %v1171 = vld [vmem:[%s1170] sm:$0xf]
      %v1173 = vcombine.high %v1169, %v1169
      %v1175 = vunpack.c.l.s4 1983009808
      %v1176 = vunpack.c.0.s8 %v1175
      %v1177 = vlaneseq
      %v1178 = vshrl.u32 %v1177, 7
      %v1179 = vsub.s32 %v1176, %v1178
      %v1180 = vrot.slane %v1169, %v1179
      %v1182 = vunpack.c.l.s4 1983009808
      %v1183 = vunpack.c.0.s8 %v1182
      %v1184 = vlaneseq
      %v1185 = vshrl.u32 %v1184, 7
      %v1186 = vsub.s32 %v1183, %v1185
      %v1187 = vrot.slane %v1173, %v1186
      %v1188 = vcombine.high %v1180, %v1180
      %1189 = vrot.lane.b32.xlu0 %v1180, 90
      %v1190 = vpop.permute.xlu0 %1189
      %1191 = vrot.lane.b32.xlu0 %v1188, 90
      %v1192 = vpop.permute.xlu0 %1191
      %1193 = vrot.lane.b32.xlu0 %v1187, 90
      %v1194 = vpop.permute.xlu0 %1193
      %vm1195 = vcmask 736256
      %v1196 = vsel %vm1195, %v1190, %v1192
      %v1197 = vsel %vm1195, %v1192, %v1194
      %v1199 = vsel %vm231, %v1171, 0
      %v1202 = vsel %vm235, %v1196, 0
      %v1205 = vsel %vm235, %v1197, 0
      %v1208 = vsel %vm235, %v1194, 0
      %1210 = vmatprep.subr.bf16.mxu0 %v1205
      %1211 = vmatpush1.bf16.msra.mxu0 %v1202
      %1212 = vmatprep.subr.bf16.mxu0 0
      %1213 = vmatpush1.bf16.msra.mxu0 0
      %1214 = vmatprep.subr.bf16.mxu0 0
      %1215 = vmatpush1.bf16.msra.mxu0 0
      %1216 = vmatprep.subr.bf16.mxu0 0
      %1217 = vmatpush1.bf16.msra.mxu0 0
      %1218 = vmatprep.subr.bf16.mxu0 0
      %1219 = vmatpush1.bf16.msra.mxu0 0
      %1220 = vmatprep.subr.bf16.mxu0 0
      %1221 = vmatpush1.bf16.msra.mxu0 0
      %1222 = vmatprep.subr.bf16.mxu0 0
      %1223 = vmatpush1.bf16.msra.mxu0 0
      %1224 = vmatprep.subr.bf16.mxu0 0
      %1225 = vmatpush1.bf16.msra.mxu0 0
      %1226 = vmatprep.subr.bf16.mxu0 0
      %1227 = vmatpush1.bf16.msra.mxu0 0
      %1228 = vmatprep.subr.bf16.mxu0 0
      %1229 = vmatpush1.bf16.msra.mxu0 0
      %1230 = vmatprep.subr.bf16.mxu0 0
      %1231 = vmatpush1.bf16.msra.mxu0 0
      %1232 = vmatprep.subr.bf16.mxu0 0
      %1233 = vmatpush1.bf16.msra.mxu0 0
      %1234 = vmatprep.subr.bf16.mxu0 0
      %1235 = vmatpush1.bf16.msra.mxu0 0
      %1236 = vmatprep.subr.bf16.mxu0 0
      %1237 = vmatpush1.bf16.msra.mxu0 0
      %1238 = vmatprep.subr.bf16.mxu0 0
      %1239 = vmatpush1.bf16.msra.mxu0 0
      %1240 = vmatprep.subr.bf16.mxu0 0
      %1241 = vmatpush1.bf16.msra.mxu0 0
      %1242 = vmatprep.mubr.bf16.mxu0 0
      %1243 = vmatmul.mubr.bf16.gmra.mrb[0].mxu0 %v1199
      %v1244 = vpop.f32.mrb[0].mxu0
      %v1245 = vadd.f32 0.0, %v1244
      %v1246 = vpop.f32.mrb[0].mxu0
      %v1247 = vadd.f32 0.0, %v1246
      %v1248 = vpop.f32.mrb[0].mxu0
      %v1249 = vpop.f32.mrb[0].mxu0
      %1250 = vdwg.mxu0
      %1251 = vmatprep.subr.bf16.mxu0 0
      %1252 = vmatpush1.bf16.msra.mxu0 %v1208
      %1253 = vmatprep.subr.bf16.mxu0 0
      %1254 = vmatpush1.bf16.msra.mxu0 0
      %1255 = vmatprep.subr.bf16.mxu0 0
      %1256 = vmatpush1.bf16.msra.mxu0 0
      %1257 = vmatprep.subr.bf16.mxu0 0
      %1258 = vmatpush1.bf16.msra.mxu0 0
      %1259 = vmatprep.subr.bf16.mxu0 0
      %1260 = vmatpush1.bf16.msra.mxu0 0
      %1261 = vmatprep.subr.bf16.mxu0 0
      %1262 = vmatpush1.bf16.msra.mxu0 0
      %1263 = vmatprep.subr.bf16.mxu0 0
      %1264 = vmatpush1.bf16.msra.mxu0 0
      %1265 = vmatprep.subr.bf16.mxu0 0
      %1266 = vmatpush1.bf16.msra.mxu0 0
      %1267 = vmatprep.subr.bf16.mxu0 0
      %1268 = vmatpush1.bf16.msra.mxu0 0
      %1269 = vmatprep.subr.bf16.mxu0 0
      %1270 = vmatpush1.bf16.msra.mxu0 0
      %1271 = vmatprep.subr.bf16.mxu0 0
      %1272 = vmatpush1.bf16.msra.mxu0 0
      %1273 = vmatprep.subr.bf16.mxu0 0
      %1274 = vmatpush1.bf16.msra.mxu0 0
      %1275 = vmatprep.subr.bf16.mxu0 0
      %1276 = vmatpush1.bf16.msra.mxu0 0
      %1277 = vmatprep.subr.bf16.mxu0 0
      %1278 = vmatpush1.bf16.msra.mxu0 0
      %1279 = vmatprep.subr.bf16.mxu0 0
      %1280 = vmatpush1.bf16.msra.mxu0 0
      %1281 = vmatprep.subr.bf16.mxu0 0
      %1282 = vmatpush1.bf16.msra.mxu0 0
      %1283 = vmatprep.mubr.bf16.mxu0 0
      %1284 = vmatmul.mubr.bf16.gmra.mrb[0].mxu0 %v1199
      %v1285 = vpop.f32.mrb[0].mxu0
      %v1286 = vadd.f32 0.0, %v1285
      %v1287 = vpop.f32.mrb[0].mxu0
      %v1288 = vpop.f32.mrb[0].mxu0
      %v1289 = vpop.f32.mrb[0].mxu0
      %1290 = vdwg.mxu0
      %v1291 = vadd.f32 %v1166, %v1245
      %v1292 = vadd.f32 %v1167, %v1247
      %v1293 = vadd.f32 %v1168, %v1286
      %1295 = vset.pattern.permute.xlu0 0
      %1296 = vperm.xlu0 %1295, %v199
      %v1297 = vpop.permute.xlu0 %1296
      %v1299 = vmul.f32 %v1291, %v1297
      %v1300 = vmul.f32 %v1292, %v1297
      %v1301 = vmul.f32 %v1293, %v1297
      %1303 = vset.pattern.permute.xlu0 0
      %1304 = vperm.xlu0 %1303, %v200
      %v1305 = vpop.permute.xlu0 %1304
      %v1307 = vadd.f32 %v1299, %v1305
      %v1308 = vadd.f32 %v1300, %v1305
      %v1309 = vadd.f32 %v1301, %v1305
      %v1310 = vadd.f32 %v1307, 3.0
      %v1311 = vadd.f32 %v1308, 3.0
      %v1312 = vadd.f32 %v1309, 3.0
      %v1313 = vmax.f32 %v1310, 0.0
      %v1314 = vmax.f32 %v1311, 0.0
      %v1315 = vmax.f32 %v1312, 0.0
      %v1316 = vmin.f32 %v1313, 6.0
      %v1317 = vmin.f32 %v1314, 6.0
      %v1318 = vmin.f32 %v1315, 6.0
      %v1319 = vmul.f32 %v1307, %v1316
      %v1320 = vmul.f32 %v1308, %v1317
      %v1321 = vmul.f32 %v1309, %v1318
      %v1322 = vmul.f32 %v1319, 0.16666667
      %v1323 = vmul.f32 %v1320, 0.16666667
      %v1324 = vmul.f32 %v1321, 0.16666667
      %1325 = vst [vmem:[%s197] sm:$0xff] %v1322
      %1326 = vst [vmem:[%s197 + $0x8] sm:$0xff] %v1323
      %vm1327 = vcmask 261120
      %1328 = vst.msk [vmem:[%s197 + $0x10] sm:$0xff] %vm1327, %v1324
      %p1329 = scmp.lt.s32.totalorder %s15, 1
      %s1330 = scalar_select %p1329, %s15, 1
      %s1331 = smul.addr %s1330, 3
      %s1332 = smul.addr %s1331, 8
      %s1333 = scalar_lea.vmem %s4, %s1332
      // Predicated region
      $region37: #{conv_bn_hswish.1} parent=35 // pred_check
        %p1334 = pneg %p122
      $region38: #{conv_bn_hswish.1} parent=35 // pred_check_branch
        %1336 = sbr.rel (%p1334) target = $region40
      $region39: #{conv_bn_hswish.1} parent=35 // pred_region
        _
      $region40: #{conv_bn_hswish.1} parent=35 // pred_fallthru
        _
    $region36: #{conv_bn_hswish.1} parent=5 // pred_fallthru
      _
    %p1337 = scmp.le.s32.totalorder 2, %s10
    // Predicated region
    $region41: #{conv_bn_hswish.1} parent=5 // pred_check
      %p1338 = pneg %p1337
    $region42: #{conv_bn_hswish.1} parent=5 // pred_check_branch
      %1340 = sbr.rel (%p1338) target = $region44
    $region43: #{conv_bn_hswish.1} parent=5 // pred_region
      %s1341 = ssub.s32 %s10, 2
      // Predicated region
      $region45: #{conv_bn_hswish.1} parent=43 // pred_check
        %p1342 = pneg %p128
      $region46: #{conv_bn_hswish.1} parent=43 // pred_check_branch
        %1344 = sbr.rel (%p1342) target = $region48
      $region47: #{conv_bn_hswish.1} parent=43 // pred_region
        %p1345 = scmp.lt.s32.totalorder %s16, 1
        %s1346 = scalar_select %p1345, %s16, 1
        %s1347 = smul.addr %s1346, 3
        %s1348 = smul.addr %s1347, 8
        %s1349 = scalar_lea.vmem %s4, %s1348
      $region48: #{conv_bn_hswish.1} parent=43 // pred_fallthru
        _
    $region44: #{conv_bn_hswish.1} parent=5 // pred_fallthru
      _
  $region6: #{conv_bn_hswish.1} parent=0 // loop_footer
    %s14 = sadd.s32 1, %s10
  $region7: #{conv_bn_hswish.1} parent=0 // loop_footer_branch
    %9 = sbr.rel target = $region3
  $region8: #{conv_bn_hswish.1} parent=0 // loop_exit
    _

</llo_original>
